<compile_context>
chip_gen: v5e
topology: v5e:2x2
jax: 0.10.0
libtpu: 0.0.40
codegen_flags: <defaults>
</compile_context>

<pallas_src>
import jax
import jax.numpy as jnp
from jax.experimental import pallas as pl
from jax.experimental.pallas import tpu as pltpu


# ---------------------------------------------------------------------------
# Pallas kernel: the entire decoder as chained VMEM-resident matmuls
# ---------------------------------------------------------------------------
def _make_decoder_kernel(layer_specs):
    """layer_specs: tuple of (n_groups, kg, act) per deconv layer."""
    n_layers = len(layer_specs)

    def kernel(*refs):
        x_ref, wfc_ref, bfc_ref = refs[0], refs[1], refs[2]
        o_ref = refs[3 + 2 * n_layers]

        # fc (affine, no activation): bf16 MXU inputs, f32 accumulation.
        h = jnp.dot(x_ref[...].astype(jnp.bfloat16), wfc_ref[...],
                    preferred_element_type=jnp.float32)
        h = h + bfc_ref[...]

        # Each deconv layer: one shared grouped weight block applied to static,
        # lane-aligned column slices of the activation matrix.
        for li, (n_groups, kg, act) in enumerate(layer_specs):
            w = refs[3 + 2 * li][...]   # (kg, ng) bf16, shared by every group
            b = refs[4 + 2 * li][...]   # (1, n_groups*ng) f32, BN/bias folded
            chunks = []
            for g in range(n_groups):   # static Python loop, 128-multiple slices
                hg = h[:, g * kg:(g + 1) * kg].astype(jnp.bfloat16)
                chunks.append(jnp.dot(hg, w, preferred_element_type=jnp.float32))
            h = chunks[0] if n_groups == 1 else jnp.concatenate(chunks, axis=1)
            h = h + b
            if act == "relu":
                h = jnp.maximum(h, 0.0)
            else:  # sigmoid; approx reciprocal runs on the otherwise-idle EUP slot
                h = pl.reciprocal(1.0 + jnp.exp(-h), approx=True)

        o_ref[...] = h.astype(o_ref.dtype)

    return kernel


# ---------------------------------------------------------------------------
# Parameter construction (deterministic, mirrors the PyTorch __init__ shapes)
# ---------------------------------------------------------------------------
def init_decoder_params(key, channels, latent_dims, output_size=(1, 32, 32)):
    out_channels, height, width = output_size
    side = int(height // (2 ** len(channels)))
    conv_in = channels[0] * side * side

    keys = iter(jax.random.split(key, 64))
    params = {
        "side": side,
        "channels": list(channels) + [out_channels],
        # nn.Linear(latent_dims, conv_in): stored as (in, out) for X @ W
        "fc_w": 0.05 * jax.random.normal(next(keys), (latent_dims, conv_in), jnp.float32),
        "fc_b": 0.05 * jax.random.normal(next(keys), (conv_in,), jnp.float32),
        "layers": [],
    }
    chans = params["channels"]
    for idx, (ci, co) in enumerate(zip(chans[:-1], chans[1:])):
        layer = {
            # nn.ConvTranspose2d weight layout: (in, out, kH, kW)
            "w": 0.1 * jax.random.normal(next(keys), (ci, co, 2, 2), jnp.float32),
            "b": 0.1 * jax.random.normal(next(keys), (co,), jnp.float32),
        }
        if idx < len(chans) - 2:  # every layer except the last has BatchNorm2d
            layer["gamma"] = 1.0 + 0.1 * jax.random.normal(next(keys), (co,), jnp.float32)
            layer["beta"] = 0.1 * jax.random.normal(next(keys), (co,), jnp.float32)
            layer["mean"] = 0.1 * jax.random.normal(next(keys), (co,), jnp.float32)
            layer["var"] = jnp.abs(1.0 + 0.1 * jax.random.normal(next(keys), (co,), jnp.float32))
        params["layers"].append(layer)
    return params


# ---------------------------------------------------------------------------
# One-time parameter preparation: fold BN/bias, build ONE grouped weight block
# per layer (no O(n_pix^2) kron), cast matmul weights to bf16.
# ---------------------------------------------------------------------------
def _pick_group_size(n_pix, ci, target_k=256):
    """Largest g dividing n_pix with g*ci <= target_k (>= 1)."""
    g = max(1, min(n_pix, target_k // max(ci, 1)))
    while n_pix % g:
        g -= 1
    return g


def prepare_fused_params(params, eps=1e-5):
    side = params["side"]
    chans = params["channels"]
    latent = params["fc_w"].shape[0]
    C0 = chans[0]

    # fc: permute output columns from PyTorch's (c, i, j) to (pixel=(i, j), c)
    fc_w = params["fc_w"].reshape(latent, C0, side, side)
    fc_w = jnp.transpose(fc_w, (0, 2, 3, 1)).reshape(latent, side * side * C0)
    fc_b = params["fc_b"].reshape(C0, side, side)
    fc_b = jnp.transpose(fc_b, (1, 2, 0)).reshape(1, side * side * C0)

    layers = []
    n_pix = side * side  # pixel count at the current layer's input
    for idx, layer in enumerate(params["layers"]):
        ci, co = chans[idx], chans[idx + 1]
        # per-pixel matrix, columns ordered (di, dj, co)
        wmat = jnp.transpose(layer["w"], (0, 2, 3, 1)).reshape(ci, 4 * co)
        if "gamma" in layer:  # eval-mode BN folded into a per-channel affine
            s = layer["gamma"] / jnp.sqrt(layer["var"] + eps)
            t = layer["beta"] - layer["mean"] * s
            act = "relu"
        else:
            s = jnp.ones((co,), jnp.float32)
            t = jnp.zeros((co,), jnp.float32)
            act = "sigmoid"
        wmat = wmat * jnp.tile(s, 4)[None, :]          # BN scale folded into weights
        col_bias = jnp.tile(layer["b"] * s + t, 4)     # conv bias + BN shift

        # ONE shared grouped block: W_g = I_g (kron) wmat with g*ci ~= 256.
        g = _pick_group_size(n_pix, ci)
        w_g = jnp.kron(jnp.eye(g, dtype=jnp.float32), wmat)   # (g*ci, g*4*co)
        b_full = jnp.tile(col_bias, n_pix)[None, :]            # (1, n_pix*4*co) f32

        layers.append({
            "w": w_g.astype(jnp.bfloat16),
            "b": b_full,
            "act": act,
            "n_groups": n_pix // g,
            "kg": g * ci,
            "out_cols": n_pix * 4 * co,
        })
        n_pix *= 4

    return {
        "fc_w": fc_w.astype(jnp.bfloat16),
        "fc_b": fc_b,
        "layers": layers,
        "side": side,
        "n_layers": len(layers),
        "out_channels": chans[-1],
        "out_cols": layers[-1]["out_cols"],
    }


# ---------------------------------------------------------------------------
# Decoder forward: ONE pallas_call + a cheap reorder of the tiny output tensor
# ---------------------------------------------------------------------------
def decoder_forward(fused, x):
    """x: (B, latent_dims) -> (B, out_channels, H, W), NCHW like PyTorch."""
    B, latent = x.shape
    n_out = fused["out_cols"]

    operands = [x, fused["fc_w"], fused["fc_b"]]
    for layer in fused["layers"]:
        operands += [layer["w"], layer["b"]]

    # Batch-row tile: 256 keeps the in/out/intermediate footprint well inside
    # v7x's 64 MiB VMEM while amortizing the ~0.35 us/step grid overhead.
    tm = B if B <= 256 else 256
    grid = (pl.cdiv(B, tm),)

    # Scoped-VMEM limit sized from the real buffer footprint (x2 headroom for the
    # chained intermediates / pipelining), clamped to [32 MiB, 64 MiB].
    def nbytes(a):
        return a.size * a.dtype.itemsize
    weight_bytes = sum(nbytes(op) for op in operands[1:])
    io_bytes = 2 * (tm * latent * x.dtype.itemsize + tm * n_out * 4)
    inter_bytes = sum(tm * l["out_cols"] * 4 for l in fused["layers"])
    vmem_limit = int(min(max(2 * (weight_bytes + io_bytes + inter_bytes),
                             32 * 1024 * 1024), 64 * 1024 * 1024))

    layer_specs = tuple((l["n_groups"], l["kg"], l["act"]) for l in fused["layers"])
    kernel = _make_decoder_kernel(layer_specs)

    def run(single_buffer_weights):
        in_specs = [pl.BlockSpec((tm, latent), lambda i: (i, 0))]
        for op in operands[1:]:
            if single_buffer_weights:
                # Grid-invariant blocks: no point double-buffering them.
                spec = pl.BlockSpec(tuple(op.shape), lambda i: (0, 0),
                                    pipeline_mode=pl.Buffered(1))
            else:
                spec = pl.BlockSpec(tuple(op.shape), lambda i: (0, 0))
            in_specs.append(spec)
        return pl.pallas_call(
            kernel,
            out_shape=jax.ShapeDtypeStruct((B, n_out), jnp.float32),
            grid=grid,
            in_specs=in_specs,
            out_specs=pl.BlockSpec((tm, n_out), lambda i: (i, 0)),
            compiler_params=pltpu.CompilerParams(
                dimension_semantics=("parallel",),
                vmem_limit_bytes=vmem_limit,
            ),
        )(*operands)

    try:
        out = run(True)
    except Exception:
        # TODO(synk): pipeline_mode=pl.Buffered(1) not accepted by this jax
        # version; fall back to default buffering (weights are <1 MiB, harmless).
        out = run(False)

    # Kernel output columns are ordered (i, j, d1i, d1j, ..., dLi, dLj, c).
    # Reorder the tiny (B, C*H*W) result to NCHW here (cheap XLA transpose),
    # keeping the shared-block weight structure intact.
    side = fused["side"]
    L = fused["n_layers"]
    co = fused["out_channels"]
    H = W = side * (2 ** L)
    y = out.reshape((B, side, side) + (2, 2) * L + (co,))
    perm = ((0, 3 + 2 * L, 1) + tuple(1 + 2 * k for k in range(1, L + 1))
            + (2,) + tuple(2 + 2 * k for k in range(1, L + 1)))
    return jnp.transpose(y, perm).reshape(B, co, H, W)


# ---------------------------------------------------------------------------
# Pure-JAX reference (independent einsum path, raw PyTorch-style params, f32)
# ---------------------------------------------------------------------------
def decoder_reference(params, x):
    B = x.shape[0]
    side = params["side"]
    chans = params["channels"]
    eps = 1e-5

    h = x @ params["fc_w"] + params["fc_b"]
    cur = h.reshape(B, chans[0], side, side)
    for layer in params["layers"]:
        _, _, H, W = cur.shape
        co = layer["w"].shape[1]
        y = jnp.einsum("bchw,cokl->bohkwl", cur, layer["w"]).reshape(B, co, 2 * H, 2 * W)
        y = y + layer["b"][None, :, None, None]
        if "gamma" in layer:
            y = (y - layer["mean"][None, :, None, None]) / jnp.sqrt(
                layer["var"][None, :, None, None] + eps
            )
            y = y * layer["gamma"][None, :, None, None] + layer["beta"][None, :, None, None]
            y = jnp.maximum(y, 0.0)
        else:
            y = jax.nn.sigmoid(y)
        cur = y
    return cur


if __name__ == "__main__":
    channels = (8, 4)          # -> conv_in_size = [8, 8, 8] for output (1, 32, 32)
    latent_dims = 16
    batch = 2

    key = jax.random.PRNGKey(0)
    pkey, xkey = jax.random.split(key)
    raw_params = init_decoder_params(pkey, channels, latent_dims, output_size=(1, 32, 32))
    fused_params = prepare_fused_params(raw_params)   # built once at init, not per forward
    x = jax.random.normal(xkey, (batch, latent_dims), jnp.float32)

    out = jax.block_until_ready(decoder_forward(fused_params, x))
    ref = jax.block_until_ready(decoder_reference(raw_params, x))

    assert out.shape == (batch, 1, 32, 32), out.shape
    # tolerance covers bf16 matmul inputs (f32 accumulation), the BN-scale fold and
    # the grouped accumulation order vs the f32 reference.
    assert jnp.allclose(out, ref, rtol=1e-2, atol=1e-2), float(jnp.max(jnp.abs(out - ref)))
    print("KERNEL_OK")
</pallas_src>

<mosaic_0001>
module attributes {stable_mosaic.version = 11 : i64} {
  func.func @kernel(%arg0: i32, %arg1: memref<2x16xf32, #tpu.memory_space<vmem>>, %arg2: memref<16x512xbf16, #tpu.memory_space<vmem>>, %arg3: memref<1x512xf32, #tpu.memory_space<vmem>>, %arg4: memref<256x512xbf16, #tpu.memory_space<vmem>>, %arg5: memref<1x1024xf32, #tpu.memory_space<vmem>>, %arg6: memref<256x256xbf16, #tpu.memory_space<vmem>>, %arg7: memref<1x1024xf32, #tpu.memory_space<vmem>>, %arg8: memref<2x1024xf32, #tpu.memory_space<vmem>>) attributes {dimension_semantics = [#tpu.dimension_semantics<parallel>], iteration_bounds = array<i64: 1>, scalar_prefetch = 0 : i64, scratch_operands = 0 : i64, tpu.core_type = #tpu.core_type<tc>, window_params = [{transform_indices = @transform_0, window_bounds = array<i64: 2, 16>}, {pipeline_mode = #tpu.pipeline_mode<synchronous>, transform_indices = @transform_1, window_bounds = array<i64: 16, 512>}, {pipeline_mode = #tpu.pipeline_mode<synchronous>, transform_indices = @transform_2, window_bounds = array<i64: 1, 512>}, {pipeline_mode = #tpu.pipeline_mode<synchronous>, transform_indices = @transform_3, window_bounds = array<i64: 256, 512>}, {pipeline_mode = #tpu.pipeline_mode<synchronous>, transform_indices = @transform_4, window_bounds = array<i64: 1, 1024>}, {pipeline_mode = #tpu.pipeline_mode<synchronous>, transform_indices = @transform_5, window_bounds = array<i64: 256, 256>}, {pipeline_mode = #tpu.pipeline_mode<synchronous>, transform_indices = @transform_6, window_bounds = array<i64: 1, 1024>}, {transform_indices = @transform_7, window_bounds = array<i64: 2, 1024>}]} {
    %c0 = arith.constant 0 : index
    %c0_0 = arith.constant 0 : index
    %0 = vector.load %arg1[%c0, %c0_0] : memref<2x16xf32, #tpu.memory_space<vmem>>, vector<2x16xf32>
    %1 = arith.truncf %0 : vector<2x16xf32> to vector<2x16xbf16>
    %c0_1 = arith.constant 0 : index
    %c0_2 = arith.constant 0 : index
    %2 = vector.load %arg2[%c0_1, %c0_2] : memref<16x512xbf16, #tpu.memory_space<vmem>>, vector<16x512xbf16>
    %cst = arith.constant dense<0.000000e+00> : vector<2x512xf32>
    %3 = tpu.matmul %1, %2, %cst {dimension_numbers = #tpu.dot_dimension_numbers<[1], [0], [0], [1], [0, 0, 1, 1], [], []>} : vector<2x16xbf16>, vector<16x512xbf16>, vector<2x512xf32> -> vector<2x512xf32>
    %c0_3 = arith.constant 0 : index
    %c0_4 = arith.constant 0 : index
    %4 = vector.load %arg3[%c0_3, %c0_4] : memref<1x512xf32, #tpu.memory_space<vmem>>, vector<1x512xf32>
    %5 = vector.broadcast %4 : vector<1x512xf32> to vector<2x512xf32>
    %6 = arith.addf %3, %5 : vector<2x512xf32>
    %c0_5 = arith.constant 0 : index
    %c0_6 = arith.constant 0 : index
    %7 = vector.load %arg4[%c0_5, %c0_6] : memref<256x512xbf16, #tpu.memory_space<vmem>>, vector<256x512xbf16>
    %c0_7 = arith.constant 0 : index
    %c0_8 = arith.constant 0 : index
    %8 = vector.load %arg5[%c0_7, %c0_8] : memref<1x1024xf32, #tpu.memory_space<vmem>>, vector<1x1024xf32>
    %9 = vector.extract_strided_slice %6 {offsets = [0, 0], sizes = [2, 256], strides = [1, 1]} : vector<2x512xf32> to vector<2x256xf32>
    %10 = arith.truncf %9 : vector<2x256xf32> to vector<2x256xbf16>
    %cst_9 = arith.constant dense<0.000000e+00> : vector<2x512xf32>
    %11 = tpu.matmul %10, %7, %cst_9 {dimension_numbers = #tpu.dot_dimension_numbers<[1], [0], [0], [1], [0, 0, 1, 1], [], []>} : vector<2x256xbf16>, vector<256x512xbf16>, vector<2x512xf32> -> vector<2x512xf32>
    %12 = vector.extract_strided_slice %6 {offsets = [0, 256], sizes = [2, 256], strides = [1, 1]} : vector<2x512xf32> to vector<2x256xf32>
    %13 = arith.truncf %12 : vector<2x256xf32> to vector<2x256xbf16>
    %cst_10 = arith.constant dense<0.000000e+00> : vector<2x512xf32>
    %14 = tpu.matmul %13, %7, %cst_10 {dimension_numbers = #tpu.dot_dimension_numbers<[1], [0], [0], [1], [0, 0, 1, 1], [], []>} : vector<2x256xbf16>, vector<256x512xbf16>, vector<2x512xf32> -> vector<2x512xf32>
    %15 = tpu.concatenate %11, %14 in 1 : vector<2x512xf32>, vector<2x512xf32> -> vector<2x1024xf32>
    %16 = vector.broadcast %8 : vector<1x1024xf32> to vector<2x1024xf32>
    %17 = arith.addf %15, %16 : vector<2x1024xf32>
    %cst_11 = arith.constant 0.000000e+00 : f32
    %18 = vector.broadcast %cst_11 : f32 to vector<2x1024xf32>
    %19 = arith.maximumf %17, %18 : vector<2x1024xf32>
    %c0_12 = arith.constant 0 : index
    %c0_13 = arith.constant 0 : index
    %20 = vector.load %arg6[%c0_12, %c0_13] : memref<256x256xbf16, #tpu.memory_space<vmem>>, vector<256x256xbf16>
    %c0_14 = arith.constant 0 : index
    %c0_15 = arith.constant 0 : index
    %21 = vector.load %arg7[%c0_14, %c0_15] : memref<1x1024xf32, #tpu.memory_space<vmem>>, vector<1x1024xf32>
    %22 = vector.extract_strided_slice %19 {offsets = [0, 0], sizes = [2, 256], strides = [1, 1]} : vector<2x1024xf32> to vector<2x256xf32>
    %23 = arith.truncf %22 : vector<2x256xf32> to vector<2x256xbf16>
    %cst_16 = arith.constant dense<0.000000e+00> : vector<2x256xf32>
    %24 = tpu.matmul %23, %20, %cst_16 {dimension_numbers = #tpu.dot_dimension_numbers<[1], [0], [0], [1], [0, 0, 1, 1], [], []>} : vector<2x256xbf16>, vector<256x256xbf16>, vector<2x256xf32> -> vector<2x256xf32>
    %25 = vector.extract_strided_slice %19 {offsets = [0, 256], sizes = [2, 256], strides = [1, 1]} : vector<2x1024xf32> to vector<2x256xf32>
    %26 = arith.truncf %25 : vector<2x256xf32> to vector<2x256xbf16>
    %cst_17 = arith.constant dense<0.000000e+00> : vector<2x256xf32>
    %27 = tpu.matmul %26, %20, %cst_17 {dimension_numbers = #tpu.dot_dimension_numbers<[1], [0], [0], [1], [0, 0, 1, 1], [], []>} : vector<2x256xbf16>, vector<256x256xbf16>, vector<2x256xf32> -> vector<2x256xf32>
    %28 = vector.extract_strided_slice %19 {offsets = [0, 512], sizes = [2, 256], strides = [1, 1]} : vector<2x1024xf32> to vector<2x256xf32>
    %29 = arith.truncf %28 : vector<2x256xf32> to vector<2x256xbf16>
    %cst_18 = arith.constant dense<0.000000e+00> : vector<2x256xf32>
    %30 = tpu.matmul %29, %20, %cst_18 {dimension_numbers = #tpu.dot_dimension_numbers<[1], [0], [0], [1], [0, 0, 1, 1], [], []>} : vector<2x256xbf16>, vector<256x256xbf16>, vector<2x256xf32> -> vector<2x256xf32>
    %31 = vector.extract_strided_slice %19 {offsets = [0, 768], sizes = [2, 256], strides = [1, 1]} : vector<2x1024xf32> to vector<2x256xf32>
    %32 = arith.truncf %31 : vector<2x256xf32> to vector<2x256xbf16>
    %cst_19 = arith.constant dense<0.000000e+00> : vector<2x256xf32>
    %33 = tpu.matmul %32, %20, %cst_19 {dimension_numbers = #tpu.dot_dimension_numbers<[1], [0], [0], [1], [0, 0, 1, 1], [], []>} : vector<2x256xbf16>, vector<256x256xbf16>, vector<2x256xf32> -> vector<2x256xf32>
    %34 = tpu.concatenate %24, %27, %30, %33 in 1 : vector<2x256xf32>, vector<2x256xf32>, vector<2x256xf32>, vector<2x256xf32> -> vector<2x1024xf32>
    %35 = vector.broadcast %21 : vector<1x1024xf32> to vector<2x1024xf32>
    %36 = arith.addf %34, %35 : vector<2x1024xf32>
    %cst_20 = arith.constant 0.000000e+00 : f32
    %37 = vector.broadcast %cst_20 : f32 to vector<2x1024xf32>
    %38 = arith.subf %37, %36 : vector<2x1024xf32>
    %39 = math.exp %38 : vector<2x1024xf32>
    %cst_21 = arith.constant 1.000000e+00 : f32
    %40 = vector.broadcast %cst_21 : f32 to vector<2x1024xf32>
    %41 = arith.addf %40, %39 : vector<2x1024xf32>
    %42 = tpu.reciprocal %41 {approx = true} : vector<2x1024xf32> -> vector<2x1024xf32>
    %c0_22 = arith.constant 0 : index
    %c0_23 = arith.constant 0 : index
    %43 = vector.load %arg8[%c0_22, %c0_23] : memref<2x1024xf32, #tpu.memory_space<vmem>>, vector<2x1024xf32>
    tpu.vector_store %arg8[%c0_22, %c0_23], %42 {strides = array<i32>} : memref<2x1024xf32, #tpu.memory_space<vmem>>, vector<2x1024xf32>,
    return
  }
  func.func @transform_0(%arg0: i32) -> (i32, i32) {
    %c0_i32 = arith.constant 0 : i32
    %c0_i32_0 = arith.constant 0 : i32
    return %arg0, %c0_i32 : i32, i32
  }
  func.func @transform_1(%arg0: i32) -> (i32, i32) {
    %c0_i32 = arith.constant 0 : i32
    %c0_i32_0 = arith.constant 0 : i32
    %c0_i32_1 = arith.constant 0 : i32
    return %c0_i32, %c0_i32_0 : i32, i32
  }
  func.func @transform_2(%arg0: i32) -> (i32, i32) {
    %c0_i32 = arith.constant 0 : i32
    %c0_i32_0 = arith.constant 0 : i32
    %c0_i32_1 = arith.constant 0 : i32
    return %c0_i32, %c0_i32_0 : i32, i32
  }
  func.func @transform_3(%arg0: i32) -> (i32, i32) {
    %c0_i32 = arith.constant 0 : i32
    %c0_i32_0 = arith.constant 0 : i32
    %c0_i32_1 = arith.constant 0 : i32
    return %c0_i32, %c0_i32_0 : i32, i32
  }
  func.func @transform_4(%arg0: i32) -> (i32, i32) {
    %c0_i32 = arith.constant 0 : i32
    %c0_i32_0 = arith.constant 0 : i32
    %c0_i32_1 = arith.constant 0 : i32
    return %c0_i32, %c0_i32_0 : i32, i32
  }
  func.func @transform_5(%arg0: i32) -> (i32, i32) {
    %c0_i32 = arith.constant 0 : i32
    %c0_i32_0 = arith.constant 0 : i32
    %c0_i32_1 = arith.constant 0 : i32
    return %c0_i32, %c0_i32_0 : i32, i32
  }
  func.func @transform_6(%arg0: i32) -> (i32, i32) {
    %c0_i32 = arith.constant 0 : i32
    %c0_i32_0 = arith.constant 0 : i32
    %c0_i32_1 = arith.constant 0 : i32
    return %c0_i32, %c0_i32_0 : i32, i32
  }
  func.func @transform_7(%arg0: i32) -> (i32, i32) {
    %c0_i32 = arith.constant 0 : i32
    %c0_i32_0 = arith.constant 0 : i32
    return %arg0, %c0_i32 : i32, i32
  }
}

module attributes {stable_mosaic.version = 11 : i64} {
  func.func @kernel(%arg0: i32, %arg1: memref<2x16xf32, #tpu.memory_space<vmem>>, %arg2: memref<16x512xbf16, #tpu.memory_space<vmem>>, %arg3: memref<1x512xf32, #tpu.memory_space<vmem>>, %arg4: memref<256x512xbf16, #tpu.memory_space<vmem>>, %arg5: memref<1x1024xf32, #tpu.memory_space<vmem>>, %arg6: memref<256x256xbf16, #tpu.memory_space<vmem>>, %arg7: memref<1x1024xf32, #tpu.memory_space<vmem>>, %arg8: memref<2x1024xf32, #tpu.memory_space<vmem>>) attributes {dimension_semantics = [#tpu.dimension_semantics<parallel>], iteration_bounds = array<i64: 1>, scalar_prefetch = 0 : i64, scratch_operands = 0 : i64, tpu.core_type = #tpu.core_type<tc>, window_params = [{transform_indices = @transform_0, window_bounds = array<i64: 2, 16>}, {pipeline_mode = #tpu.pipeline_mode<synchronous>, transform_indices = @transform_1, window_bounds = array<i64: 16, 512>}, {pipeline_mode = #tpu.pipeline_mode<synchronous>, transform_indices = @transform_2, window_bounds = array<i64: 1, 512>}, {pipeline_mode = #tpu.pipeline_mode<synchronous>, transform_indices = @transform_3, window_bounds = array<i64: 256, 512>}, {pipeline_mode = #tpu.pipeline_mode<synchronous>, transform_indices = @transform_4, window_bounds = array<i64: 1, 1024>}, {pipeline_mode = #tpu.pipeline_mode<synchronous>, transform_indices = @transform_5, window_bounds = array<i64: 256, 256>}, {pipeline_mode = #tpu.pipeline_mode<synchronous>, transform_indices = @transform_6, window_bounds = array<i64: 1, 1024>}, {transform_indices = @transform_7, window_bounds = array<i64: 2, 1024>}]} {
    %c0 = arith.constant 0 : index
    %c0_0 = arith.constant 0 : index
    %0 = vector.load %arg1[%c0, %c0_0] : memref<2x16xf32, #tpu.memory_space<vmem>>, vector<2x16xf32>
    %1 = arith.truncf %0 : vector<2x16xf32> to vector<2x16xbf16>
    %c0_1 = arith.constant 0 : index
    %c0_2 = arith.constant 0 : index
    %2 = vector.load %arg2[%c0_1, %c0_2] : memref<16x512xbf16, #tpu.memory_space<vmem>>, vector<16x512xbf16>
    %cst = arith.constant dense<0.000000e+00> : vector<2x512xf32>
    %3 = tpu.matmul %1, %2, %cst {dimension_numbers = #tpu.dot_dimension_numbers<[1], [0], [0], [1], [0, 0, 1, 1], [], []>} : vector<2x16xbf16>, vector<16x512xbf16>, vector<2x512xf32> -> vector<2x512xf32>
    %c0_3 = arith.constant 0 : index
    %c0_4 = arith.constant 0 : index
    %4 = vector.load %arg3[%c0_3, %c0_4] : memref<1x512xf32, #tpu.memory_space<vmem>>, vector<1x512xf32>
    %5 = vector.broadcast %4 : vector<1x512xf32> to vector<2x512xf32>
    %6 = arith.addf %3, %5 : vector<2x512xf32>
    %c0_5 = arith.constant 0 : index
    %c0_6 = arith.constant 0 : index
    %7 = vector.load %arg4[%c0_5, %c0_6] : memref<256x512xbf16, #tpu.memory_space<vmem>>, vector<256x512xbf16>
    %c0_7 = arith.constant 0 : index
    %c0_8 = arith.constant 0 : index
    %8 = vector.load %arg5[%c0_7, %c0_8] : memref<1x1024xf32, #tpu.memory_space<vmem>>, vector<1x1024xf32>
    %9 = vector.extract_strided_slice %6 {offsets = [0, 0], sizes = [2, 256], strides = [1, 1]} : vector<2x512xf32> to vector<2x256xf32>
    %10 = arith.truncf %9 : vector<2x256xf32> to vector<2x256xbf16>
    %cst_9 = arith.constant dense<0.000000e+00> : vector<2x512xf32>
    %11 = tpu.matmul %10, %7, %cst_9 {dimension_numbers = #tpu.dot_dimension_numbers<[1], [0], [0], [1], [0, 0, 1, 1], [], []>} : vector<2x256xbf16>, vector<256x512xbf16>, vector<2x512xf32> -> vector<2x512xf32>
    %12 = vector.extract_strided_slice %6 {offsets = [0, 256], sizes = [2, 256], strides = [1, 1]} : vector<2x512xf32> to vector<2x256xf32>
    %13 = arith.truncf %12 : vector<2x256xf32> to vector<2x256xbf16>
    %cst_10 = arith.constant dense<0.000000e+00> : vector<2x512xf32>
    %14 = tpu.matmul %13, %7, %cst_10 {dimension_numbers = #tpu.dot_dimension_numbers<[1], [0], [0], [1], [0, 0, 1, 1], [], []>} : vector<2x256xbf16>, vector<256x512xbf16>, vector<2x512xf32> -> vector<2x512xf32>
    %15 = tpu.concatenate %11, %14 in 1 : vector<2x512xf32>, vector<2x512xf32> -> vector<2x1024xf32>
    %16 = vector.broadcast %8 : vector<1x1024xf32> to vector<2x1024xf32>
    %17 = arith.addf %15, %16 : vector<2x1024xf32>
    %cst_11 = arith.constant 0.000000e+00 : f32
    %18 = vector.broadcast %cst_11 : f32 to vector<2x1024xf32>
    %19 = arith.maximumf %17, %18 : vector<2x1024xf32>
    %c0_12 = arith.constant 0 : index
    %c0_13 = arith.constant 0 : index
    %20 = vector.load %arg6[%c0_12, %c0_13] : memref<256x256xbf16, #tpu.memory_space<vmem>>, vector<256x256xbf16>
    %c0_14 = arith.constant 0 : index
    %c0_15 = arith.constant 0 : index
    %21 = vector.load %arg7[%c0_14, %c0_15] : memref<1x1024xf32, #tpu.memory_space<vmem>>, vector<1x1024xf32>
    %22 = vector.extract_strided_slice %19 {offsets = [0, 0], sizes = [2, 256], strides = [1, 1]} : vector<2x1024xf32> to vector<2x256xf32>
    %23 = arith.truncf %22 : vector<2x256xf32> to vector<2x256xbf16>
    %cst_16 = arith.constant dense<0.000000e+00> : vector<2x256xf32>
    %24 = tpu.matmul %23, %20, %cst_16 {dimension_numbers = #tpu.dot_dimension_numbers<[1], [0], [0], [1], [0, 0, 1, 1], [], []>} : vector<2x256xbf16>, vector<256x256xbf16>, vector<2x256xf32> -> vector<2x256xf32>
    %25 = vector.extract_strided_slice %19 {offsets = [0, 256], sizes = [2, 256], strides = [1, 1]} : vector<2x1024xf32> to vector<2x256xf32>
    %26 = arith.truncf %25 : vector<2x256xf32> to vector<2x256xbf16>
    %cst_17 = arith.constant dense<0.000000e+00> : vector<2x256xf32>
    %27 = tpu.matmul %26, %20, %cst_17 {dimension_numbers = #tpu.dot_dimension_numbers<[1], [0], [0], [1], [0, 0, 1, 1], [], []>} : vector<2x256xbf16>, vector<256x256xbf16>, vector<2x256xf32> -> vector<2x256xf32>
    %28 = vector.extract_strided_slice %19 {offsets = [0, 512], sizes = [2, 256], strides = [1, 1]} : vector<2x1024xf32> to vector<2x256xf32>
    %29 = arith.truncf %28 : vector<2x256xf32> to vector<2x256xbf16>
    %cst_18 = arith.constant dense<0.000000e+00> : vector<2x256xf32>
    %30 = tpu.matmul %29, %20, %cst_18 {dimension_numbers = #tpu.dot_dimension_numbers<[1], [0], [0], [1], [0, 0, 1, 1], [], []>} : vector<2x256xbf16>, vector<256x256xbf16>, vector<2x256xf32> -> vector<2x256xf32>
    %31 = vector.extract_strided_slice %19 {offsets = [0, 768], sizes = [2, 256], strides = [1, 1]} : vector<2x1024xf32> to vector<2x256xf32>
    %32 = arith.truncf %31 : vector<2x256xf32> to vector<2x256xbf16>
    %cst_19 = arith.constant dense<0.000000e+00> : vector<2x256xf32>
    %33 = tpu.matmul %32, %20, %cst_19 {dimension_numbers = #tpu.dot_dimension_numbers<[1], [0], [0], [1], [0, 0, 1, 1], [], []>} : vector<2x256xbf16>, vector<256x256xbf16>, vector<2x256xf32> -> vector<2x256xf32>
    %34 = tpu.concatenate %24, %27, %30, %33 in 1 : vector<2x256xf32>, vector<2x256xf32>, vector<2x256xf32>, vector<2x256xf32> -> vector<2x1024xf32>
    %35 = vector.broadcast %21 : vector<1x1024xf32> to vector<2x1024xf32>
    %36 = arith.addf %34, %35 : vector<2x1024xf32>
    %cst_20 = arith.constant 0.000000e+00 : f32
    %37 = vector.broadcast %cst_20 : f32 to vector<2x1024xf32>
    %38 = arith.subf %37, %36 : vector<2x1024xf32>
    %39 = math.exp %38 : vector<2x1024xf32>
    %cst_21 = arith.constant 1.000000e+00 : f32
    %40 = vector.broadcast %cst_21 : f32 to vector<2x1024xf32>
    %41 = arith.addf %40, %39 : vector<2x1024xf32>
    %42 = tpu.reciprocal %41 {approx = true} : vector<2x1024xf32> -> vector<2x1024xf32>
    %c0_22 = arith.constant 0 : index
    %c0_23 = arith.constant 0 : index
    %43 = vector.load %arg8[%c0_22, %c0_23] : memref<2x1024xf32, #tpu.memory_space<vmem>>, vector<2x1024xf32>
    tpu.vector_store %arg8[%c0_22, %c0_23], %42 {strides = array<i32>} : memref<2x1024xf32, #tpu.memory_space<vmem>>, vector<2x1024xf32>,
    return
  }
  func.func @transform_0(%arg0: i32) -> (i32, i32) {
    %c0_i32 = arith.constant 0 : i32
    %c0_i32_0 = arith.constant 0 : i32
    return %arg0, %c0_i32 : i32, i32
  }
  func.func @transform_1(%arg0: i32) -> (i32, i32) {
    %c0_i32 = arith.constant 0 : i32
    %c0_i32_0 = arith.constant 0 : i32
    %c0_i32_1 = arith.constant 0 : i32
    return %c0_i32, %c0_i32_0 : i32, i32
  }
  func.func @transform_2(%arg0: i32) -> (i32, i32) {
    %c0_i32 = arith.constant 0 : i32
    %c0_i32_0 = arith.constant 0 : i32
    %c0_i32_1 = arith.constant 0 : i32
    return %c0_i32, %c0_i32_0 : i32, i32
  }
  func.func @transform_3(%arg0: i32) -> (i32, i32) {
    %c0_i32 = arith.constant 0 : i32
    %c0_i32_0 = arith.constant 0 : i32
    %c0_i32_1 = arith.constant 0 : i32
    return %c0_i32, %c0_i32_0 : i32, i32
  }
  func.func @transform_4(%arg0: i32) -> (i32, i32) {
    %c0_i32 = arith.constant 0 : i32
    %c0_i32_0 = arith.constant 0 : i32
    %c0_i32_1 = arith.constant 0 : i32
    return %c0_i32, %c0_i32_0 : i32, i32
  }
  func.func @transform_5(%arg0: i32) -> (i32, i32) {
    %c0_i32 = arith.constant 0 : i32
    %c0_i32_0 = arith.constant 0 : i32
    %c0_i32_1 = arith.constant 0 : i32
    return %c0_i32, %c0_i32_0 : i32, i32
  }
  func.func @transform_6(%arg0: i32) -> (i32, i32) {
    %c0_i32 = arith.constant 0 : i32
    %c0_i32_0 = arith.constant 0 : i32
    %c0_i32_1 = arith.constant 0 : i32
    return %c0_i32, %c0_i32_0 : i32, i32
  }
  func.func @transform_7(%arg0: i32) -> (i32, i32) {
    %c0_i32 = arith.constant 0 : i32
    %c0_i32_0 = arith.constant 0 : i32
    return %arg0, %c0_i32 : i32, i32
  }
}

</mosaic_0001>

<llo_original>
// kernel: tpu_custom_call.1
$region0: #{tpu_custom_call.1}
  #allocation0 [shape = 'u32[]', space=smem, size = 0x4, offset = 0x4, fixed_abs, tag = 'smem constant byte address 0x4 - core index']
  #allocation1 [shape = 'u32[72,128]{1,0:T(1,128)}', space=vmem, size = 0x9000, scoped, tag = 'internal scratch']
  %s0 = inlined_call_operand.hbm [shape: f32[2,16], index: 0, kind: input, shape index: {}]
  %s1 = inlined_call_operand.hbm [shape: bf16[16,512], index: 1, kind: input, shape index: {}]
  %s2 = inlined_call_operand.hbm [shape: f32[1,512], index: 2, kind: input, shape index: {}]
  %s3 = inlined_call_operand.hbm [shape: bf16[256,512], index: 3, kind: input, shape index: {}]
  %s4 = inlined_call_operand.hbm [shape: f32[1,1024], index: 4, kind: input, shape index: {}]
  %s5 = inlined_call_operand.hbm [shape: bf16[256,256], index: 5, kind: input, shape index: {}]
  %s6 = inlined_call_operand.hbm [shape: f32[1,1024], index: 6, kind: input, shape index: {}]
  %s7 = inlined_call_operand.hbm [shape: f32[2,1024], index: 7, kind: output, shape index: {}]
  %s8 = sld [smem:[#allocation0]]
  $region66: #{tpu_custom_call.1} parent=0
    _
  %s10 = ssub.s32 1, %s8
  %s11 = scalar_select 0, %s10, %s8
  $region1: #{tpu_custom_call.1} parent=0
    #allocation2 [shape = 'u8[1024]{0}', space=vmem, size = 0x400, scoped, tag = 'input window, operand 0, single buffered']
    #allocation3 [shape = 's32[1]{0}', space=sflag, size = 0x4, scoped, tag = 'scoped memory for tpu_custom_call.1']
    #allocation4 [shape = 's32[1]{0}', space=sflag, size = 0x4, scoped, tag = 'scoped memory for tpu_custom_call.1']
    #allocation5 [shape = 'u8[16384]{0}', space=vmem, size = 0x4000, scoped, tag = 'input window, operand 1, single buffered']
    #allocation6 [shape = 's32[1]{0}', space=sflag, size = 0x4, scoped, tag = 'scoped memory for tpu_custom_call.1']
    #allocation7 [shape = 'u8[2048]{0}', space=vmem, size = 0x800, scoped, tag = 'input window, operand 2, single buffered']
    #allocation8 [shape = 'u8[262144]{0}', space=vmem, size = 0x40000, scoped, tag = 'input window, operand 3, single buffered']
    #allocation9 [shape = 's32[1]{0}', space=sflag, size = 0x4, scoped, tag = 'scoped memory for tpu_custom_call.1']
    #allocation10 [shape = 'u8[4096]{0}', space=vmem, size = 0x1000, scoped, tag = 'input window, operand 4, single buffered']
    #allocation11 [shape = 'u8[131072]{0}', space=vmem, size = 0x20000, scoped, tag = 'input window, operand 5, single buffered']
    #allocation12 [shape = 's32[1]{0}', space=sflag, size = 0x4, scoped, tag = 'scoped memory for tpu_custom_call.1']
    #allocation13 [shape = 'u8[4096]{0}', space=vmem, size = 0x1000, scoped, tag = 'input window, operand 6, single buffered']
    #allocation14 [shape = 'u8[8192]{0}', space=vmem, size = 0x2000, scoped, tag = 'output window, operand 0, single buffered']
    %12 = vsyncpa [#allocation3], 0
    %13 = vsyncpa [#allocation6], 0
    %14 = vsyncpa [#allocation9], 0
    %15 = vsyncpa [#allocation12], 0
    %16 = vsyncpa [#allocation4], 0
    // Predicated region
    $region2: #{tpu_custom_call.1} parent=1 // pred_check
      _
    $region3: #{tpu_custom_call.1} parent=1 // pred_check_branch
      %18 = sbr.rel (0) target = $region5
    $region4: #{tpu_custom_call.1} parent=1 // pred_region
      %20 = vsyncadd [#allocation3], 0
      %s22 = sshll.u32 %s0, 4
      %s23 = int_to_ptr.hbm [resolvable:$true] %s22
      %s24 = sshll.u32 [#allocation2], 4
      %s25 = int_to_ptr.vmem [resolvable:$true] %s24
      %27 = dma.hbm_to_vmem [thread:$0]  %s23, 32, %s25, [#allocation3]
    $region5: #{tpu_custom_call.1} parent=1 // pred_fallthru
      _
    // Predicated region
    $region6: #{tpu_custom_call.1} parent=1 // pred_check
      _
    $region7: #{tpu_custom_call.1} parent=1 // pred_check_branch
      %29 = sbr.rel (0) target = $region9
    $region8: #{tpu_custom_call.1} parent=1 // pred_region
      %31 = vsyncadd [#allocation6], 0
      %s32 = sshll.u32 %s1, 4
      %s33 = int_to_ptr.hbm [resolvable:$true] %s32
      %s34 = sshll.u32 [#allocation5], 4
      %s35 = int_to_ptr.vmem [resolvable:$true] %s34
      %40 = dma.hbm_to_vmem [thread:$0]  %s33, 512, %s35, [#allocation6], 256, 256, 16
    $region9: #{tpu_custom_call.1} parent=1 // pred_fallthru
      _
    // Predicated region
    $region10: #{tpu_custom_call.1} parent=1 // pred_check
      _
    $region11: #{tpu_custom_call.1} parent=1 // pred_check_branch
      %42 = sbr.rel (0) target = $region13
    $region12: #{tpu_custom_call.1} parent=1 // pred_region
      %44 = vsyncadd [#allocation6], 0
      %s46 = sshll.u32 %s2, 4
      %s47 = int_to_ptr.hbm [resolvable:$true] %s46
      %s48 = sshll.u32 [#allocation7], 4
      %s49 = int_to_ptr.vmem [resolvable:$true] %s48
      %51 = dma.hbm_to_vmem [thread:$0]  %s47, 64, %s49, [#allocation6]
    $region13: #{tpu_custom_call.1} parent=1 // pred_fallthru
      _
    // Predicated region
    $region14: #{tpu_custom_call.1} parent=1 // pred_check
      _
    $region15: #{tpu_custom_call.1} parent=1 // pred_check_branch
      %53 = sbr.rel (0) target = $region17
    $region16: #{tpu_custom_call.1} parent=1 // pred_region
      %55 = vsyncadd [#allocation9], 0
      %s56 = sshll.u32 %s3, 4
      %s57 = int_to_ptr.hbm [resolvable:$true] %s56
      %s58 = sshll.u32 [#allocation8], 4
      %s59 = int_to_ptr.vmem [resolvable:$true] %s58
      %64 = dma.hbm_to_vmem [thread:$0]  %s57, 8192, %s59, [#allocation9], 256, 256, 16
    $region17: #{tpu_custom_call.1} parent=1 // pred_fallthru
      _
    // Predicated region
    $region18: #{tpu_custom_call.1} parent=1 // pred_check
      _
    $region19: #{tpu_custom_call.1} parent=1 // pred_check_branch
      %66 = sbr.rel (0) target = $region21
    $region20: #{tpu_custom_call.1} parent=1 // pred_region
      %68 = vsyncadd [#allocation9], 0
      %s70 = sshll.u32 %s4, 4
      %s71 = int_to_ptr.hbm [resolvable:$true] %s70
      %s72 = sshll.u32 [#allocation10], 4
      %s73 = int_to_ptr.vmem [resolvable:$true] %s72
      %75 = dma.hbm_to_vmem [thread:$0]  %s71, 128, %s73, [#allocation9]
    $region21: #{tpu_custom_call.1} parent=1 // pred_fallthru
      _
    // Predicated region
    $region22: #{tpu_custom_call.1} parent=1 // pred_check
      _
    $region23: #{tpu_custom_call.1} parent=1 // pred_check_branch
      %77 = sbr.rel (0) target = $region25
    $region24: #{tpu_custom_call.1} parent=1 // pred_region
      %79 = vsyncadd [#allocation12], 0
      %s80 = sshll.u32 %s5, 4
      %s81 = int_to_ptr.hbm [resolvable:$true] %s80
      %s82 = sshll.u32 [#allocation11], 4
      %s83 = int_to_ptr.vmem [resolvable:$true] %s82
      %88 = dma.hbm_to_vmem [thread:$0]  %s81, 4096, %s83, [#allocation12], 128, 128, 8
    $region25: #{tpu_custom_call.1} parent=1 // pred_fallthru
      _
    // Predicated region
    $region26: #{tpu_custom_call.1} parent=1 // pred_check
      _
    $region27: #{tpu_custom_call.1} parent=1 // pred_check_branch
      %90 = sbr.rel (0) target = $region29
    $region28: #{tpu_custom_call.1} parent=1 // pred_region
      %92 = vsyncadd [#allocation12], 0
      %s94 = sshll.u32 %s6, 4
      %s95 = int_to_ptr.hbm [resolvable:$true] %s94
      %s96 = sshll.u32 [#allocation13], 4
      %s97 = int_to_ptr.vmem [resolvable:$true] %s96
      %99 = dma.hbm_to_vmem [thread:$0]  %s95, 128, %s97, [#allocation12]
    $region29: #{tpu_custom_call.1} parent=1 // pred_fallthru
      _
    // Predicated region
    $region30: #{tpu_custom_call.1} parent=1 // pred_check
      _
    $region31: #{tpu_custom_call.1} parent=1 // pred_check_branch
      %101 = sbr.rel (0) target = $region33
    $region32: #{tpu_custom_call.1} parent=1 // pred_region
      %103 = dma.done [#allocation3], 32
    $region33: #{tpu_custom_call.1} parent=1 // pred_fallthru
      _
    // Predicated region
    $region34: #{tpu_custom_call.1} parent=1 // pred_check
      _
    $region35: #{tpu_custom_call.1} parent=1 // pred_check_branch
      %105 = sbr.rel (0) target = $region37
    $region36: #{tpu_custom_call.1} parent=1 // pred_region
      %107 = dma.done [#allocation6], 512
    $region37: #{tpu_custom_call.1} parent=1 // pred_fallthru
      _
    // Predicated region
    $region38: #{tpu_custom_call.1} parent=1 // pred_check
      _
    $region39: #{tpu_custom_call.1} parent=1 // pred_check_branch
      %109 = sbr.rel (0) target = $region41
    $region40: #{tpu_custom_call.1} parent=1 // pred_region
      %111 = dma.done [#allocation6], 64
    $region41: #{tpu_custom_call.1} parent=1 // pred_fallthru
      _
    // Predicated region
    $region42: #{tpu_custom_call.1} parent=1 // pred_check
      _
    $region43: #{tpu_custom_call.1} parent=1 // pred_check_branch
      %113 = sbr.rel (0) target = $region45
    $region44: #{tpu_custom_call.1} parent=1 // pred_region
      %115 = dma.done [#allocation9], 8192
    $region45: #{tpu_custom_call.1} parent=1 // pred_fallthru
      _
    // Predicated region
    $region46: #{tpu_custom_call.1} parent=1 // pred_check
      _
    $region47: #{tpu_custom_call.1} parent=1 // pred_check_branch
      %117 = sbr.rel (0) target = $region49
    $region48: #{tpu_custom_call.1} parent=1 // pred_region
      %119 = dma.done [#allocation9], 128
    $region49: #{tpu_custom_call.1} parent=1 // pred_fallthru
      _
    // Predicated region
    $region50: #{tpu_custom_call.1} parent=1 // pred_check
      _
    $region51: #{tpu_custom_call.1} parent=1 // pred_check_branch
      %121 = sbr.rel (0) target = $region53
    $region52: #{tpu_custom_call.1} parent=1 // pred_region
      %123 = dma.done [#allocation12], 4096
    $region53: #{tpu_custom_call.1} parent=1 // pred_fallthru
      _
    // Predicated region
    $region54: #{tpu_custom_call.1} parent=1 // pred_check
      _
    $region55: #{tpu_custom_call.1} parent=1 // pred_check_branch
      %125 = sbr.rel (0) target = $region57
    $region56: #{tpu_custom_call.1} parent=1 // pred_region
      %127 = dma.done [#allocation12], 128
    $region57: #{tpu_custom_call.1} parent=1 // pred_fallthru
      _
    %v129 = vld [vmem:[#allocation2] sm:$0x3]
    %v130 = vpack.c.bf16 %v129, %v129
    %v131 = vld [vmem:[#allocation5] sm:$0xff]
    %v132 = vld [vmem:[#allocation5 + $0x8] sm:$0xff]
    %v133 = vld [vmem:[#allocation5 + $0x10] sm:$0xff]
    %v134 = vld [vmem:[#allocation5 + $0x18] sm:$0xff]
    %v135 = vld [vmem:[#allocation7] sm:$0xf]
    %v137 = vperm.slane %v135, 0
    %v138 = vperm.slane %v135, 1
    %v139 = vperm.slane %v135, 2
    %v140 = vperm.slane %v135, 3
    %v149 = vunpack.c.l.b16 %v131
    %v150 = vunpack.c.h.b16 %v131
    %v151 = vunpack.c.l.b16 %v132
    %v152 = vunpack.c.h.b16 %v132
    %v153 = vunpack.c.l.b16 %v133
    %v154 = vunpack.c.h.b16 %v133
    %v155 = vunpack.c.l.b16 %v134
    %v156 = vunpack.c.h.b16 %v134
    %v157 = vpack.c.b16 %v153, %v149
    %v158 = vpack.c.b16 %v154, %v150
    %v159 = vpack.c.b16 %v155, %v151
    %v160 = vpack.c.b16 %v156, %v152
    %vm165 = vcmask 130048
    %v167 = vsel %vm165, %v130, 0
    %169 = vmatpush.bf16.msra.mxu0 0
    %170 = vmatpush.bf16.msra.mxu0 0
    %171 = vmatpush.bf16.msra.mxu0 0
    %172 = vmatpush.bf16.msra.mxu0 0
    %173 = vmatpush.bf16.msra.mxu0 0
    %174 = vmatpush.bf16.msra.mxu0 0
    %175 = vmatpush.bf16.msra.mxu0 0
    %176 = vmatpush.bf16.msra.mxu0 %v157
    %177 = vmatmul.bf16.gmra.mxu0 %v167
    %v178 = vpop.f32.mrf.mxu0
    %v179 = vadd.f32 %v137, %v178
    %v180 = vpop.f32.mrf.mxu0
    %181 = vdwg.mxu0
    %182 = vmatpush.bf16.msra.mxu0 0
    %183 = vmatpush.bf16.msra.mxu0 0
    %184 = vmatpush.bf16.msra.mxu0 0
    %185 = vmatpush.bf16.msra.mxu0 0
    %186 = vmatpush.bf16.msra.mxu0 0
    %187 = vmatpush.bf16.msra.mxu0 0
    %188 = vmatpush.bf16.msra.mxu0 0
    %189 = vmatpush.bf16.msra.mxu0 %v158
    %190 = vmatmul.bf16.gmra.mxu0 %v167
    %v191 = vpop.f32.mrf.mxu0
    %v192 = vadd.f32 %v138, %v191
    %v193 = vpop.f32.mrf.mxu0
    %194 = vdwg.mxu0
    %195 = vmatpush.bf16.msra.mxu0 0
    %196 = vmatpush.bf16.msra.mxu0 0
    %197 = vmatpush.bf16.msra.mxu0 0
    %198 = vmatpush.bf16.msra.mxu0 0
    %199 = vmatpush.bf16.msra.mxu0 0
    %200 = vmatpush.bf16.msra.mxu0 0
    %201 = vmatpush.bf16.msra.mxu0 0
    %202 = vmatpush.bf16.msra.mxu0 %v159
    %203 = vmatmul.bf16.gmra.mxu0 %v167
    %v204 = vpop.f32.mrf.mxu0
    %v205 = vadd.f32 %v139, %v204
    %v206 = vpop.f32.mrf.mxu0
    %207 = vdwg.mxu0
    %208 = vmatpush.bf16.msra.mxu0 0
    %209 = vmatpush.bf16.msra.mxu0 0
    %210 = vmatpush.bf16.msra.mxu0 0
    %211 = vmatpush.bf16.msra.mxu0 0
    %212 = vmatpush.bf16.msra.mxu0 0
    %213 = vmatpush.bf16.msra.mxu0 0
    %214 = vmatpush.bf16.msra.mxu0 0
    %215 = vmatpush.bf16.msra.mxu0 %v160
    %216 = vmatmul.bf16.gmra.mxu0 %v167
    %v217 = vpop.f32.mrf.mxu0
    %v218 = vadd.f32 %v140, %v217
    %v219 = vpop.f32.mrf.mxu0
    %220 = vdwg.mxu0
    %v221 = vld [vmem:[#allocation8] sm:$0xff]
    %v222 = vld [vmem:[#allocation8 + $0x8] sm:$0xff]
    %v223 = vld [vmem:[#allocation8 + $0x10] sm:$0xff]
    %v224 = vld [vmem:[#allocation8 + $0x18] sm:$0xff]
    %v225 = vld [vmem:[#allocation8 + $0x20] sm:$0xff]
    %v226 = vld [vmem:[#allocation8 + $0x28] sm:$0xff]
    %v227 = vld [vmem:[#allocation8 + $0x30] sm:$0xff]
    %v228 = vld [vmem:[#allocation8 + $0x38] sm:$0xff]
    %v229 = vld [vmem:[#allocation8 + $0x40] sm:$0xff]
    %v230 = vld [vmem:[#allocation8 + $0x48] sm:$0xff]
    %v231 = vld [vmem:[#allocation8 + $0x50] sm:$0xff]
    %v232 = vld [vmem:[#allocation8 + $0x58] sm:$0xff]
    %v233 = vld [vmem:[#allocation8 + $0x60] sm:$0xff]
    %v234 = vld [vmem:[#allocation8 + $0x68] sm:$0xff]
    %v235 = vld [vmem:[#allocation8 + $0x70] sm:$0xff]
    %v236 = vld [vmem:[#allocation8 + $0x78] sm:$0xff]
    %v237 = vld [vmem:[#allocation8 + $0x80] sm:$0xff]
    %v238 = vld [vmem:[#allocation8 + $0x88] sm:$0xff]
    %v239 = vld [vmem:[#allocation8 + $0x90] sm:$0xff]
    %v240 = vld [vmem:[#allocation8 + $0x98] sm:$0xff]
    %v241 = vld [vmem:[#allocation8 + $0xa0] sm:$0xff]
    %v242 = vld [vmem:[#allocation8 + $0xa8] sm:$0xff]
    %v243 = vld [vmem:[#allocation8 + $0xb0] sm:$0xff]
    %v244 = vld [vmem:[#allocation8 + $0xb8] sm:$0xff]
    %v245 = vld [vmem:[#allocation8 + $0xc0] sm:$0xff]
    %v246 = vld [vmem:[#allocation8 + $0xc8] sm:$0xff]
    %v247 = vld [vmem:[#allocation8 + $0xd0] sm:$0xff]
    %v248 = vld [vmem:[#allocation8 + $0xd8] sm:$0xff]
    %v249 = vld [vmem:[#allocation8 + $0xe0] sm:$0xff]
    %v250 = vld [vmem:[#allocation8 + $0xe8] sm:$0xff]
    %v251 = vld [vmem:[#allocation8 + $0xf0] sm:$0xff]
    %v252 = vld [vmem:[#allocation8 + $0xf8] sm:$0xff]
    %v253 = vld [vmem:[#allocation8 + $0x100] sm:$0xff]
    %v254 = vld [vmem:[#allocation8 + $0x108] sm:$0xff]
    %v255 = vld [vmem:[#allocation8 + $0x110] sm:$0xff]
    %v256 = vld [vmem:[#allocation8 + $0x118] sm:$0xff]
    %v257 = vld [vmem:[#allocation8 + $0x120] sm:$0xff]
    %v258 = vld [vmem:[#allocation8 + $0x128] sm:$0xff]
    %v259 = vld [vmem:[#allocation8 + $0x130] sm:$0xff]
    %v260 = vld [vmem:[#allocation8 + $0x138] sm:$0xff]
    %v261 = vld [vmem:[#allocation8 + $0x140] sm:$0xff]
    %v262 = vld [vmem:[#allocation8 + $0x148] sm:$0xff]
    %v263 = vld [vmem:[#allocation8 + $0x150] sm:$0xff]
    %v264 = vld [vmem:[#allocation8 + $0x158] sm:$0xff]
    %v265 = vld [vmem:[#allocation8 + $0x160] sm:$0xff]
    %v266 = vld [vmem:[#allocation8 + $0x168] sm:$0xff]
    %v267 = vld [vmem:[#allocation8 + $0x170] sm:$0xff]
    %v268 = vld [vmem:[#allocation8 + $0x178] sm:$0xff]
    %v269 = vld [vmem:[#allocation8 + $0x180] sm:$0xff]
    %v270 = vld [vmem:[#allocation8 + $0x188] sm:$0xff]
    %v271 = vld [vmem:[#allocation8 + $0x190] sm:$0xff]
    %v272 = vld [vmem:[#allocation8 + $0x198] sm:$0xff]
    %v273 = vld [vmem:[#allocation8 + $0x1a0] sm:$0xff]
    %v274 = vld [vmem:[#allocation8 + $0x1a8] sm:$0xff]
    %v275 = vld [vmem:[#allocation8 + $0x1b0] sm:$0xff]
    %v276 = vld [vmem:[#allocation8 + $0x1b8] sm:$0xff]
    %v277 = vld [vmem:[#allocation8 + $0x1c0] sm:$0xff]
    %v278 = vld [vmem:[#allocation8 + $0x1c8] sm:$0xff]
    %v279 = vld [vmem:[#allocation8 + $0x1d0] sm:$0xff]
    %v280 = vld [vmem:[#allocation8 + $0x1d8] sm:$0xff]
    %v281 = vld [vmem:[#allocation8 + $0x1e0] sm:$0xff]
    %v282 = vld [vmem:[#allocation8 + $0x1e8] sm:$0xff]
    %v283 = vld [vmem:[#allocation8 + $0x1f0] sm:$0xff]
    %v284 = vld [vmem:[#allocation8 + $0x1f8] sm:$0xff]
    %v285 = vld [vmem:[#allocation10] sm:$0xff]
    %v286 = vpack.c.bf16 %v179, %v179
    %v287 = vpack.c.bf16 %v192, %v192
    %v352 = vunpack.c.l.b16 %v221
    %v353 = vunpack.c.h.b16 %v221
    %v354 = vunpack.c.l.b16 %v222
    %v355 = vunpack.c.h.b16 %v222
    %v356 = vunpack.c.l.b16 %v223
    %v357 = vunpack.c.h.b16 %v223
    %v358 = vunpack.c.l.b16 %v224
    %v359 = vunpack.c.h.b16 %v224
    %v360 = vunpack.c.l.b16 %v225
    %v361 = vunpack.c.h.b16 %v225
    %v362 = vunpack.c.l.b16 %v226
    %v363 = vunpack.c.h.b16 %v226
    %v364 = vunpack.c.l.b16 %v227
    %v365 = vunpack.c.h.b16 %v227
    %v366 = vunpack.c.l.b16 %v228
    %v367 = vunpack.c.h.b16 %v228
    %v368 = vunpack.c.l.b16 %v229
    %v369 = vunpack.c.h.b16 %v229
    %v370 = vunpack.c.l.b16 %v230
    %v371 = vunpack.c.h.b16 %v230
    %v372 = vunpack.c.l.b16 %v231
    %v373 = vunpack.c.h.b16 %v231
    %v374 = vunpack.c.l.b16 %v232
    %v375 = vunpack.c.h.b16 %v232
    %v376 = vunpack.c.l.b16 %v233
    %v377 = vunpack.c.h.b16 %v233
    %v378 = vunpack.c.l.b16 %v234
    %v379 = vunpack.c.h.b16 %v234
    %v380 = vunpack.c.l.b16 %v235
    %v381 = vunpack.c.h.b16 %v235
    %v382 = vunpack.c.l.b16 %v236
    %v383 = vunpack.c.h.b16 %v236
    %v384 = vunpack.c.l.b16 %v237
    %v385 = vunpack.c.h.b16 %v237
    %v386 = vunpack.c.l.b16 %v238
    %v387 = vunpack.c.h.b16 %v238
    %v388 = vunpack.c.l.b16 %v239
    %v389 = vunpack.c.h.b16 %v239
    %v390 = vunpack.c.l.b16 %v240
    %v391 = vunpack.c.h.b16 %v240
    %v392 = vunpack.c.l.b16 %v241
    %v393 = vunpack.c.h.b16 %v241
    %v394 = vunpack.c.l.b16 %v242
    %v395 = vunpack.c.h.b16 %v242
    %v396 = vunpack.c.l.b16 %v243
    %v397 = vunpack.c.h.b16 %v243
    %v398 = vunpack.c.l.b16 %v244
    %v399 = vunpack.c.h.b16 %v244
    %v400 = vunpack.c.l.b16 %v245
    %v401 = vunpack.c.h.b16 %v245
    %v402 = vunpack.c.l.b16 %v246
    %v403 = vunpack.c.h.b16 %v246
    %v404 = vunpack.c.l.b16 %v247
    %v405 = vunpack.c.h.b16 %v247
    %v406 = vunpack.c.l.b16 %v248
    %v407 = vunpack.c.h.b16 %v248
    %v408 = vunpack.c.l.b16 %v249
    %v409 = vunpack.c.h.b16 %v249
    %v410 = vunpack.c.l.b16 %v250
    %v411 = vunpack.c.h.b16 %v250
    %v412 = vunpack.c.l.b16 %v251
    %v413 = vunpack.c.h.b16 %v251
    %v414 = vunpack.c.l.b16 %v252
    %v415 = vunpack.c.h.b16 %v252
    %v416 = vunpack.c.l.b16 %v253
    %v417 = vunpack.c.h.b16 %v253
    %v418 = vunpack.c.l.b16 %v254
    %v419 = vunpack.c.h.b16 %v254
    %v420 = vunpack.c.l.b16 %v255
    %v421 = vunpack.c.h.b16 %v255
    %v422 = vunpack.c.l.b16 %v256
    %v423 = vunpack.c.h.b16 %v256
    %v424 = vunpack.c.l.b16 %v257
    %v425 = vunpack.c.h.b16 %v257
    %v426 = vunpack.c.l.b16 %v258
    %v427 = vunpack.c.h.b16 %v258
    %v428 = vunpack.c.l.b16 %v259
    %v429 = vunpack.c.h.b16 %v259
    %v430 = vunpack.c.l.b16 %v260
    %v431 = vunpack.c.h.b16 %v260
    %v432 = vunpack.c.l.b16 %v261
    %v433 = vunpack.c.h.b16 %v261
    %v434 = vunpack.c.l.b16 %v262
    %v435 = vunpack.c.h.b16 %v262
    %v436 = vunpack.c.l.b16 %v263
    %v437 = vunpack.c.h.b16 %v263
    %v438 = vunpack.c.l.b16 %v264
    %v439 = vunpack.c.h.b16 %v264
    %v440 = vunpack.c.l.b16 %v265
    %v441 = vunpack.c.h.b16 %v265
    %v442 = vunpack.c.l.b16 %v266
    %v443 = vunpack.c.h.b16 %v266
    %v444 = vunpack.c.l.b16 %v267
    %v445 = vunpack.c.h.b16 %v267
    %v446 = vunpack.c.l.b16 %v268
    %v447 = vunpack.c.h.b16 %v268
    %v448 = vunpack.c.l.b16 %v269
    %v449 = vunpack.c.h.b16 %v269
    %v450 = vunpack.c.l.b16 %v270
    %v451 = vunpack.c.h.b16 %v270
    %v452 = vunpack.c.l.b16 %v271
    %v453 = vunpack.c.h.b16 %v271
    %v454 = vunpack.c.l.b16 %v272
    %v455 = vunpack.c.h.b16 %v272
    %v456 = vunpack.c.l.b16 %v273
    %v457 = vunpack.c.h.b16 %v273
    %v458 = vunpack.c.l.b16 %v274
    %v459 = vunpack.c.h.b16 %v274
    %v460 = vunpack.c.l.b16 %v275
    %v461 = vunpack.c.h.b16 %v275
    %v462 = vunpack.c.l.b16 %v276
    %v463 = vunpack.c.h.b16 %v276
    %v464 = vunpack.c.l.b16 %v277
    %v465 = vunpack.c.h.b16 %v277
    %v466 = vunpack.c.l.b16 %v278
    %v467 = vunpack.c.h.b16 %v278
    %v468 = vunpack.c.l.b16 %v279
    %v469 = vunpack.c.h.b16 %v279
    %v470 = vunpack.c.l.b16 %v280
    %v471 = vunpack.c.h.b16 %v280
    %v472 = vunpack.c.l.b16 %v281
    %v473 = vunpack.c.h.b16 %v281
    %v474 = vunpack.c.l.b16 %v282
    %v475 = vunpack.c.h.b16 %v282
    %v476 = vunpack.c.l.b16 %v283
    %v477 = vunpack.c.h.b16 %v283
    %v478 = vunpack.c.l.b16 %v284
    %v479 = vunpack.c.h.b16 %v284
    %v480 = vpack.c.b16 %v356, %v352
    %v481 = vpack.c.b16 %v357, %v353
    %v482 = vpack.c.b16 %v358, %v354
    %v483 = vpack.c.b16 %v359, %v355
    %v484 = vpack.c.b16 %v364, %v360
    %v485 = vpack.c.b16 %v365, %v361
    %v486 = vpack.c.b16 %v366, %v362
    %v487 = vpack.c.b16 %v367, %v363
    %v488 = vpack.c.b16 %v372, %v368
    %v489 = vpack.c.b16 %v373, %v369
    %v490 = vpack.c.b16 %v374, %v370
    %v491 = vpack.c.b16 %v375, %v371
    %v492 = vpack.c.b16 %v380, %v376
    %v493 = vpack.c.b16 %v381, %v377
    %v494 = vpack.c.b16 %v382, %v378
    %v495 = vpack.c.b16 %v383, %v379
    %v496 = vpack.c.b16 %v388, %v384
    %v497 = vpack.c.b16 %v389, %v385
    %v498 = vpack.c.b16 %v390, %v386
    %v499 = vpack.c.b16 %v391, %v387
    %v500 = vpack.c.b16 %v396, %v392
    %v501 = vpack.c.b16 %v397, %v393
    %v502 = vpack.c.b16 %v398, %v394
    %v503 = vpack.c.b16 %v399, %v395
    %v504 = vpack.c.b16 %v404, %v400
    %v505 = vpack.c.b16 %v405, %v401
    %v506 = vpack.c.b16 %v406, %v402
    %v507 = vpack.c.b16 %v407, %v403
    %v508 = vpack.c.b16 %v412, %v408
    %v509 = vpack.c.b16 %v413, %v409
    %v510 = vpack.c.b16 %v414, %v410
    %v511 = vpack.c.b16 %v415, %v411
    %v512 = vpack.c.b16 %v420, %v416
    %v513 = vpack.c.b16 %v421, %v417
    %v514 = vpack.c.b16 %v422, %v418
    %v515 = vpack.c.b16 %v423, %v419
    %v516 = vpack.c.b16 %v428, %v424
    %v517 = vpack.c.b16 %v429, %v425
    %v518 = vpack.c.b16 %v430, %v426
    %v519 = vpack.c.b16 %v431, %v427
    %v520 = vpack.c.b16 %v436, %v432
    %v521 = vpack.c.b16 %v437, %v433
    %v522 = vpack.c.b16 %v438, %v434
    %v523 = vpack.c.b16 %v439, %v435
    %v524 = vpack.c.b16 %v444, %v440
    %v525 = vpack.c.b16 %v445, %v441
    %v526 = vpack.c.b16 %v446, %v442
    %v527 = vpack.c.b16 %v447, %v443
    %v528 = vpack.c.b16 %v452, %v448
    %v529 = vpack.c.b16 %v453, %v449
    %v530 = vpack.c.b16 %v454, %v450
    %v531 = vpack.c.b16 %v455, %v451
    %v532 = vpack.c.b16 %v460, %v456
    %v533 = vpack.c.b16 %v461, %v457
    %v534 = vpack.c.b16 %v462, %v458
    %v535 = vpack.c.b16 %v463, %v459
    %v536 = vpack.c.b16 %v468, %v464
    %v537 = vpack.c.b16 %v469, %v465
    %v538 = vpack.c.b16 %v470, %v466
    %v539 = vpack.c.b16 %v471, %v467
    %v540 = vpack.c.b16 %v476, %v472
    %v541 = vpack.c.b16 %v477, %v473
    %v542 = vpack.c.b16 %v478, %v474
    %v543 = vpack.c.b16 %v479, %v475
    %608 = vmatpush.bf16.msra.mxu0 %v508
    %609 = vmatpush.bf16.msra.mxu0 %v504
    %610 = vmatpush.bf16.msra.mxu0 %v500
    %611 = vmatpush.bf16.msra.mxu0 %v496
    %612 = vmatpush.bf16.msra.mxu0 %v492
    %613 = vmatpush.bf16.msra.mxu0 %v488
    %614 = vmatpush.bf16.msra.mxu0 %v484
    %615 = vmatpush.bf16.msra.mxu0 %v480
    %616 = vmatmul.bf16.gmra.mxu0 %v286
    %v617 = vpop.f32.mrf.mxu0
    %v618 = vadd.f32 0.0, %v617
    %v619 = vpop.f32.mrf.mxu0
    %620 = vdwg.mxu0
    %621 = vmatpush.bf16.msra.mxu0 %v540
    %622 = vmatpush.bf16.msra.mxu0 %v536
    %623 = vmatpush.bf16.msra.mxu0 %v532
    %624 = vmatpush.bf16.msra.mxu0 %v528
    %625 = vmatpush.bf16.msra.mxu0 %v524
    %626 = vmatpush.bf16.msra.mxu0 %v520
    %627 = vmatpush.bf16.msra.mxu0 %v516
    %628 = vmatpush.bf16.msra.mxu0 %v512
    %629 = vmatmul.bf16.gmra.mxu0 %v287
    %v630 = vpop.f32.mrf.mxu0
    %v631 = vadd.f32 %v618, %v630
    %v632 = vpop.f32.mrf.mxu0
    %633 = vdwg.mxu0
    %634 = vmatpush.bf16.msra.mxu0 %v509
    %635 = vmatpush.bf16.msra.mxu0 %v505
    %636 = vmatpush.bf16.msra.mxu0 %v501
    %637 = vmatpush.bf16.msra.mxu0 %v497
    %638 = vmatpush.bf16.msra.mxu0 %v493
    %639 = vmatpush.bf16.msra.mxu0 %v489
    %640 = vmatpush.bf16.msra.mxu0 %v485
    %641 = vmatpush.bf16.msra.mxu0 %v481
    %642 = vmatmul.bf16.gmra.mxu0 %v286
    %v643 = vpop.f32.mrf.mxu0
    %v644 = vadd.f32 0.0, %v643
    %v645 = vpop.f32.mrf.mxu0
    %646 = vdwg.mxu0
    %647 = vmatpush.bf16.msra.mxu0 %v541
    %648 = vmatpush.bf16.msra.mxu0 %v537
    %649 = vmatpush.bf16.msra.mxu0 %v533
    %650 = vmatpush.bf16.msra.mxu0 %v529
    %651 = vmatpush.bf16.msra.mxu0 %v525
    %652 = vmatpush.bf16.msra.mxu0 %v521
    %653 = vmatpush.bf16.msra.mxu0 %v517
    %654 = vmatpush.bf16.msra.mxu0 %v513
    %655 = vmatmul.bf16.gmra.mxu0 %v287
    %v656 = vpop.f32.mrf.mxu0
    %v657 = vadd.f32 %v644, %v656
    %v658 = vpop.f32.mrf.mxu0
    %659 = vdwg.mxu0
    %660 = vmatpush.bf16.msra.mxu0 %v510
    %661 = vmatpush.bf16.msra.mxu0 %v506
    %662 = vmatpush.bf16.msra.mxu0 %v502
    %663 = vmatpush.bf16.msra.mxu0 %v498
    %664 = vmatpush.bf16.msra.mxu0 %v494
    %665 = vmatpush.bf16.msra.mxu0 %v490
    %666 = vmatpush.bf16.msra.mxu0 %v486
    %667 = vmatpush.bf16.msra.mxu0 %v482
    %668 = vmatmul.bf16.gmra.mxu0 %v286
    %v669 = vpop.f32.mrf.mxu0
    %v670 = vadd.f32 0.0, %v669
    %v671 = vpop.f32.mrf.mxu0
    %672 = vdwg.mxu0
    %673 = vmatpush.bf16.msra.mxu0 %v542
    %674 = vmatpush.bf16.msra.mxu0 %v538
    %675 = vmatpush.bf16.msra.mxu0 %v534
    %676 = vmatpush.bf16.msra.mxu0 %v530
    %677 = vmatpush.bf16.msra.mxu0 %v526
    %678 = vmatpush.bf16.msra.mxu0 %v522
    %679 = vmatpush.bf16.msra.mxu0 %v518
    %680 = vmatpush.bf16.msra.mxu0 %v514
    %681 = vmatmul.bf16.gmra.mxu0 %v287
    %v682 = vpop.f32.mrf.mxu0
    %v683 = vadd.f32 %v670, %v682
    %v684 = vpop.f32.mrf.mxu0
    %685 = vdwg.mxu0
    %686 = vmatpush.bf16.msra.mxu0 %v511
    %687 = vmatpush.bf16.msra.mxu0 %v507
    %688 = vmatpush.bf16.msra.mxu0 %v503
    %689 = vmatpush.bf16.msra.mxu0 %v499
    %690 = vmatpush.bf16.msra.mxu0 %v495
    %691 = vmatpush.bf16.msra.mxu0 %v491
    %692 = vmatpush.bf16.msra.mxu0 %v487
    %693 = vmatpush.bf16.msra.mxu0 %v483
    %694 = vmatmul.bf16.gmra.mxu0 %v286
    %v695 = vpop.f32.mrf.mxu0
    %v696 = vadd.f32 0.0, %v695
    %v697 = vpop.f32.mrf.mxu0
    %698 = vdwg.mxu0
    %699 = vmatpush.bf16.msra.mxu0 %v543
    %700 = vmatpush.bf16.msra.mxu0 %v539
    %701 = vmatpush.bf16.msra.mxu0 %v535
    %702 = vmatpush.bf16.msra.mxu0 %v531
    %703 = vmatpush.bf16.msra.mxu0 %v527
    %704 = vmatpush.bf16.msra.mxu0 %v523
    %705 = vmatpush.bf16.msra.mxu0 %v519
    %706 = vmatpush.bf16.msra.mxu0 %v515
    %707 = vmatmul.bf16.gmra.mxu0 %v287
    %v708 = vpop.f32.mrf.mxu0
    %v709 = vadd.f32 %v696, %v708
    %v710 = vpop.f32.mrf.mxu0
    %711 = vdwg.mxu0
    %v712 = vpack.c.bf16 %v205, %v205
    %v713 = vpack.c.bf16 %v218, %v218
    %714 = vmatpush.bf16.msra.mxu0 %v508
    %715 = vmatpush.bf16.msra.mxu0 %v504
    %716 = vmatpush.bf16.msra.mxu0 %v500
    %717 = vmatpush.bf16.msra.mxu0 %v496
    %718 = vmatpush.bf16.msra.mxu0 %v492
    %719 = vmatpush.bf16.msra.mxu0 %v488
    %720 = vmatpush.bf16.msra.mxu0 %v484
    %721 = vmatpush.bf16.msra.mxu0 %v480
    %722 = vmatmul.bf16.gmra.mxu0 %v712
    %v723 = vpop.f32.mrf.mxu0
    %v724 = vadd.f32 0.0, %v723
    %v725 = vpop.f32.mrf.mxu0
    %726 = vdwg.mxu0
    %727 = vmatpush.bf16.msra.mxu0 %v540
    %728 = vmatpush.bf16.msra.mxu0 %v536
    %729 = vmatpush.bf16.msra.mxu0 %v532
    %730 = vmatpush.bf16.msra.mxu0 %v528
    %731 = vmatpush.bf16.msra.mxu0 %v524
    %732 = vmatpush.bf16.msra.mxu0 %v520
    %733 = vmatpush.bf16.msra.mxu0 %v516
    %734 = vmatpush.bf16.msra.mxu0 %v512
    %735 = vmatmul.bf16.gmra.mxu0 %v713
    %v736 = vpop.f32.mrf.mxu0
    %v737 = vadd.f32 %v724, %v736
    %v738 = vpop.f32.mrf.mxu0
    %739 = vdwg.mxu0
    %740 = vmatpush.bf16.msra.mxu0 %v509
    %741 = vmatpush.bf16.msra.mxu0 %v505
    %742 = vmatpush.bf16.msra.mxu0 %v501
    %743 = vmatpush.bf16.msra.mxu0 %v497
    %744 = vmatpush.bf16.msra.mxu0 %v493
    %745 = vmatpush.bf16.msra.mxu0 %v489
    %746 = vmatpush.bf16.msra.mxu0 %v485
    %747 = vmatpush.bf16.msra.mxu0 %v481
    %748 = vmatmul.bf16.gmra.mxu0 %v712
    %v749 = vpop.f32.mrf.mxu0
    %v750 = vadd.f32 0.0, %v749
    %v751 = vpop.f32.mrf.mxu0
    %752 = vdwg.mxu0
    %753 = vmatpush.bf16.msra.mxu0 %v541
    %754 = vmatpush.bf16.msra.mxu0 %v537
    %755 = vmatpush.bf16.msra.mxu0 %v533
    %756 = vmatpush.bf16.msra.mxu0 %v529
    %757 = vmatpush.bf16.msra.mxu0 %v525
    %758 = vmatpush.bf16.msra.mxu0 %v521
    %759 = vmatpush.bf16.msra.mxu0 %v517
    %760 = vmatpush.bf16.msra.mxu0 %v513
    %761 = vmatmul.bf16.gmra.mxu0 %v713
    %v762 = vpop.f32.mrf.mxu0
    %v763 = vadd.f32 %v750, %v762
    %v764 = vpop.f32.mrf.mxu0
    %765 = vdwg.mxu0
    %766 = vmatpush.bf16.msra.mxu0 %v510
    %767 = vmatpush.bf16.msra.mxu0 %v506
    %768 = vmatpush.bf16.msra.mxu0 %v502
    %769 = vmatpush.bf16.msra.mxu0 %v498
    %770 = vmatpush.bf16.msra.mxu0 %v494
    %771 = vmatpush.bf16.msra.mxu0 %v490
    %772 = vmatpush.bf16.msra.mxu0 %v486
    %773 = vmatpush.bf16.msra.mxu0 %v482
    %774 = vmatmul.bf16.gmra.mxu0 %v712
    %v775 = vpop.f32.mrf.mxu0
    %v776 = vadd.f32 0.0, %v775
    %v777 = vpop.f32.mrf.mxu0
    %778 = vdwg.mxu0
    %779 = vmatpush.bf16.msra.mxu0 %v542
    %780 = vmatpush.bf16.msra.mxu0 %v538
    %781 = vmatpush.bf16.msra.mxu0 %v534
    %782 = vmatpush.bf16.msra.mxu0 %v530
    %783 = vmatpush.bf16.msra.mxu0 %v526
    %784 = vmatpush.bf16.msra.mxu0 %v522
    %785 = vmatpush.bf16.msra.mxu0 %v518
    %786 = vmatpush.bf16.msra.mxu0 %v514
    %787 = vmatmul.bf16.gmra.mxu0 %v713
    %v788 = vpop.f32.mrf.mxu0
    %v789 = vadd.f32 %v776, %v788
    %v790 = vpop.f32.mrf.mxu0
    %791 = vdwg.mxu0
    %792 = vmatpush.bf16.msra.mxu0 %v511
    %793 = vmatpush.bf16.msra.mxu0 %v507
    %794 = vmatpush.bf16.msra.mxu0 %v503
    %795 = vmatpush.bf16.msra.mxu0 %v499
    %796 = vmatpush.bf16.msra.mxu0 %v495
    %797 = vmatpush.bf16.msra.mxu0 %v491
    %798 = vmatpush.bf16.msra.mxu0 %v487
    %799 = vmatpush.bf16.msra.mxu0 %v483
    %800 = vmatmul.bf16.gmra.mxu0 %v712
    %v801 = vpop.f32.mrf.mxu0
    %v802 = vadd.f32 0.0, %v801
    %v803 = vpop.f32.mrf.mxu0
    %804 = vdwg.mxu0
    %805 = vmatpush.bf16.msra.mxu0 %v543
    %806 = vmatpush.bf16.msra.mxu0 %v539
    %807 = vmatpush.bf16.msra.mxu0 %v535
    %808 = vmatpush.bf16.msra.mxu0 %v531
    %809 = vmatpush.bf16.msra.mxu0 %v527
    %810 = vmatpush.bf16.msra.mxu0 %v523
    %811 = vmatpush.bf16.msra.mxu0 %v519
    %812 = vmatpush.bf16.msra.mxu0 %v515
    %813 = vmatmul.bf16.gmra.mxu0 %v713
    %v814 = vpop.f32.mrf.mxu0
    %v815 = vadd.f32 %v802, %v814
    %v816 = vpop.f32.mrf.mxu0
    %817 = vdwg.mxu0
    %v819 = vperm.slane %v285, 0
    %v820 = vperm.slane %v285, 1
    %v821 = vperm.slane %v285, 2
    %v822 = vperm.slane %v285, 3
    %v823 = vperm.slane %v285, 4
    %v824 = vperm.slane %v285, 5
    %v825 = vperm.slane %v285, 6
    %v826 = vperm.slane %v285, 7
    %v835 = vadd.f32 %v631, %v819
    %v836 = vadd.f32 %v657, %v820
    %v837 = vadd.f32 %v683, %v821
    %v838 = vadd.f32 %v709, %v822
    %v839 = vadd.f32 %v737, %v823
    %v840 = vadd.f32 %v763, %v824
    %v841 = vadd.f32 %v789, %v825
    %v842 = vadd.f32 %v815, %v826
    %v843 = vmax.f32 %v835, 0.0
    %v844 = vmax.f32 %v836, 0.0
    %v845 = vmax.f32 %v837, 0.0
    %v846 = vmax.f32 %v838, 0.0
    %v847 = vmax.f32 %v839, 0.0
    %v848 = vmax.f32 %v840, 0.0
    %v849 = vmax.f32 %v841, 0.0
    %v850 = vmax.f32 %v842, 0.0
    %v851 = vld [vmem:[#allocation11] sm:$0xff]
    %v852 = vld [vmem:[#allocation11 + $0x8] sm:$0xff]
    %v853 = vld [vmem:[#allocation11 + $0x10] sm:$0xff]
    %v854 = vld [vmem:[#allocation11 + $0x18] sm:$0xff]
    %v855 = vld [vmem:[#allocation11 + $0x20] sm:$0xff]
    %v856 = vld [vmem:[#allocation11 + $0x28] sm:$0xff]
    %v857 = vld [vmem:[#allocation11 + $0x30] sm:$0xff]
    %v858 = vld [vmem:[#allocation11 + $0x38] sm:$0xff]
    %v859 = vld [vmem:[#allocation11 + $0x40] sm:$0xff]
    %v860 = vld [vmem:[#allocation11 + $0x48] sm:$0xff]
    %v861 = vld [vmem:[#allocation11 + $0x50] sm:$0xff]
    %v862 = vld [vmem:[#allocation11 + $0x58] sm:$0xff]
    %v863 = vld [vmem:[#allocation11 + $0x60] sm:$0xff]
    %v864 = vld [vmem:[#allocation11 + $0x68] sm:$0xff]
    %v865 = vld [vmem:[#allocation11 + $0x70] sm:$0xff]
    %v866 = vld [vmem:[#allocation11 + $0x78] sm:$0xff]
    %v867 = vld [vmem:[#allocation11 + $0x80] sm:$0xff]
    %v868 = vld [vmem:[#allocation11 + $0x88] sm:$0xff]
    %v869 = vld [vmem:[#allocation11 + $0x90] sm:$0xff]
    %v870 = vld [vmem:[#allocation11 + $0x98] sm:$0xff]
    %v871 = vld [vmem:[#allocation11 + $0xa0] sm:$0xff]
    %v872 = vld [vmem:[#allocation11 + $0xa8] sm:$0xff]
    %v873 = vld [vmem:[#allocation11 + $0xb0] sm:$0xff]
    %v874 = vld [vmem:[#allocation11 + $0xb8] sm:$0xff]
    %v875 = vld [vmem:[#allocation11 + $0xc0] sm:$0xff]
    %v876 = vld [vmem:[#allocation11 + $0xc8] sm:$0xff]
    %v877 = vld [vmem:[#allocation11 + $0xd0] sm:$0xff]
    %v878 = vld [vmem:[#allocation11 + $0xd8] sm:$0xff]
    %v879 = vld [vmem:[#allocation11 + $0xe0] sm:$0xff]
    %v880 = vld [vmem:[#allocation11 + $0xe8] sm:$0xff]
    %v881 = vld [vmem:[#allocation11 + $0xf0] sm:$0xff]
    %v882 = vld [vmem:[#allocation11 + $0xf8] sm:$0xff]
    %v883 = vld [vmem:[#allocation13] sm:$0xff]
    %v884 = vpack.c.bf16 %v843, %v843
    %v885 = vpack.c.bf16 %v844, %v844
    %v918 = vunpack.c.l.b16 %v851
    %v919 = vunpack.c.h.b16 %v851
    %v920 = vunpack.c.l.b16 %v852
    %v921 = vunpack.c.h.b16 %v852
    %v922 = vunpack.c.l.b16 %v853
    %v923 = vunpack.c.h.b16 %v853
    %v924 = vunpack.c.l.b16 %v854
    %v925 = vunpack.c.h.b16 %v854
    %v926 = vunpack.c.l.b16 %v855
    %v927 = vunpack.c.h.b16 %v855
    %v928 = vunpack.c.l.b16 %v856
    %v929 = vunpack.c.h.b16 %v856
    %v930 = vunpack.c.l.b16 %v857
    %v931 = vunpack.c.h.b16 %v857
    %v932 = vunpack.c.l.b16 %v858
    %v933 = vunpack.c.h.b16 %v858
    %v934 = vunpack.c.l.b16 %v859
    %v935 = vunpack.c.h.b16 %v859
    %v936 = vunpack.c.l.b16 %v860
    %v937 = vunpack.c.h.b16 %v860
    %v938 = vunpack.c.l.b16 %v861
    %v939 = vunpack.c.h.b16 %v861
    %v940 = vunpack.c.l.b16 %v862
    %v941 = vunpack.c.h.b16 %v862
    %v942 = vunpack.c.l.b16 %v863
    %v943 = vunpack.c.h.b16 %v863
    %v944 = vunpack.c.l.b16 %v864
    %v945 = vunpack.c.h.b16 %v864
    %v946 = vunpack.c.l.b16 %v865
    %v947 = vunpack.c.h.b16 %v865
    %v948 = vunpack.c.l.b16 %v866
    %v949 = vunpack.c.h.b16 %v866
    %v950 = vunpack.c.l.b16 %v867
    %v951 = vunpack.c.h.b16 %v867
    %v952 = vunpack.c.l.b16 %v868
    %v953 = vunpack.c.h.b16 %v868
    %v954 = vunpack.c.l.b16 %v869
    %v955 = vunpack.c.h.b16 %v869
    %v956 = vunpack.c.l.b16 %v870
    %v957 = vunpack.c.h.b16 %v870
    %v958 = vunpack.c.l.b16 %v871
    %v959 = vunpack.c.h.b16 %v871
    %v960 = vunpack.c.l.b16 %v872
    %v961 = vunpack.c.h.b16 %v872
    %v962 = vunpack.c.l.b16 %v873
    %v963 = vunpack.c.h.b16 %v873
    %v964 = vunpack.c.l.b16 %v874
    %v965 = vunpack.c.h.b16 %v874
    %v966 = vunpack.c.l.b16 %v875
    %v967 = vunpack.c.h.b16 %v875
    %v968 = vunpack.c.l.b16 %v876
    %v969 = vunpack.c.h.b16 %v876
    %v970 = vunpack.c.l.b16 %v877
    %v971 = vunpack.c.h.b16 %v877
    %v972 = vunpack.c.l.b16 %v878
    %v973 = vunpack.c.h.b16 %v878
    %v974 = vunpack.c.l.b16 %v879
    %v975 = vunpack.c.h.b16 %v879
    %v976 = vunpack.c.l.b16 %v880
    %v977 = vunpack.c.h.b16 %v880
    %v978 = vunpack.c.l.b16 %v881
    %v979 = vunpack.c.h.b16 %v881
    %v980 = vunpack.c.l.b16 %v882
    %v981 = vunpack.c.h.b16 %v882
    %v982 = vpack.c.b16 %v920, %v918
    %v983 = vpack.c.b16 %v921, %v919
    %v984 = vpack.c.b16 %v924, %v922
    %v985 = vpack.c.b16 %v925, %v923
    %v986 = vpack.c.b16 %v928, %v926
    %v987 = vpack.c.b16 %v929, %v927
    %v988 = vpack.c.b16 %v932, %v930
    %v989 = vpack.c.b16 %v933, %v931
    %v990 = vpack.c.b16 %v936, %v934
    %v991 = vpack.c.b16 %v937, %v935
    %v992 = vpack.c.b16 %v940, %v938
    %v993 = vpack.c.b16 %v941, %v939
    %v994 = vpack.c.b16 %v944, %v942
    %v995 = vpack.c.b16 %v945, %v943
    %v996 = vpack.c.b16 %v948, %v946
    %v997 = vpack.c.b16 %v949, %v947
    %v998 = vpack.c.b16 %v952, %v950
    %v999 = vpack.c.b16 %v953, %v951
    %v1000 = vpack.c.b16 %v956, %v954
    %v1001 = vpack.c.b16 %v957, %v955
    %v1002 = vpack.c.b16 %v960, %v958
    %v1003 = vpack.c.b16 %v961, %v959
    %v1004 = vpack.c.b16 %v964, %v962
    %v1005 = vpack.c.b16 %v965, %v963
    %v1006 = vpack.c.b16 %v968, %v966
    %v1007 = vpack.c.b16 %v969, %v967
    %v1008 = vpack.c.b16 %v972, %v970
    %v1009 = vpack.c.b16 %v973, %v971
    %v1010 = vpack.c.b16 %v976, %v974
    %v1011 = vpack.c.b16 %v977, %v975
    %v1012 = vpack.c.b16 %v980, %v978
    %v1013 = vpack.c.b16 %v981, %v979
    %1046 = vmatpush.bf16.msra.mxu0 %v996
    %1047 = vmatpush.bf16.msra.mxu0 %v994
    %1048 = vmatpush.bf16.msra.mxu0 %v992
    %1049 = vmatpush.bf16.msra.mxu0 %v990
    %1050 = vmatpush.bf16.msra.mxu0 %v988
    %1051 = vmatpush.bf16.msra.mxu0 %v986
    %1052 = vmatpush.bf16.msra.mxu0 %v984
    %1053 = vmatpush.bf16.msra.mxu0 %v982
    %1054 = vmatmul.bf16.gmra.mxu0 %v884
    %v1055 = vpop.f32.mrf.mxu0
    %v1056 = vadd.f32 0.0, %v1055
    %v1057 = vpop.f32.mrf.mxu0
    %1058 = vdwg.mxu0
    %1059 = vmatpush.bf16.msra.mxu0 %v1012
    %1060 = vmatpush.bf16.msra.mxu0 %v1010
    %1061 = vmatpush.bf16.msra.mxu0 %v1008
    %1062 = vmatpush.bf16.msra.mxu0 %v1006
    %1063 = vmatpush.bf16.msra.mxu0 %v1004
    %1064 = vmatpush.bf16.msra.mxu0 %v1002
    %1065 = vmatpush.bf16.msra.mxu0 %v1000
    %1066 = vmatpush.bf16.msra.mxu0 %v998
    %1067 = vmatmul.bf16.gmra.mxu0 %v885
    %v1068 = vpop.f32.mrf.mxu0
    %v1069 = vadd.f32 %v1056, %v1068
    %v1070 = vpop.f32.mrf.mxu0
    %1071 = vdwg.mxu0
    %1072 = vmatpush.bf16.msra.mxu0 %v997
    %1073 = vmatpush.bf16.msra.mxu0 %v995
    %1074 = vmatpush.bf16.msra.mxu0 %v993
    %1075 = vmatpush.bf16.msra.mxu0 %v991
    %1076 = vmatpush.bf16.msra.mxu0 %v989
    %1077 = vmatpush.bf16.msra.mxu0 %v987
    %1078 = vmatpush.bf16.msra.mxu0 %v985
    %1079 = vmatpush.bf16.msra.mxu0 %v983
    %1080 = vmatmul.bf16.gmra.mxu0 %v884
    %v1081 = vpop.f32.mrf.mxu0
    %v1082 = vadd.f32 0.0, %v1081
    %v1083 = vpop.f32.mrf.mxu0
    %1084 = vdwg.mxu0
    %1085 = vmatpush.bf16.msra.mxu0 %v1013
    %1086 = vmatpush.bf16.msra.mxu0 %v1011
    %1087 = vmatpush.bf16.msra.mxu0 %v1009
    %1088 = vmatpush.bf16.msra.mxu0 %v1007
    %1089 = vmatpush.bf16.msra.mxu0 %v1005
    %1090 = vmatpush.bf16.msra.mxu0 %v1003
    %1091 = vmatpush.bf16.msra.mxu0 %v1001
    %1092 = vmatpush.bf16.msra.mxu0 %v999
    %1093 = vmatmul.bf16.gmra.mxu0 %v885
    %v1094 = vpop.f32.mrf.mxu0
    %v1095 = vadd.f32 %v1082, %v1094
    %v1096 = vpop.f32.mrf.mxu0
    %1097 = vdwg.mxu0
    %v1098 = vpack.c.bf16 %v845, %v845
    %v1099 = vpack.c.bf16 %v846, %v846
    %1100 = vmatpush.bf16.msra.mxu0 %v996
    %1101 = vmatpush.bf16.msra.mxu0 %v994
    %1102 = vmatpush.bf16.msra.mxu0 %v992
    %1103 = vmatpush.bf16.msra.mxu0 %v990
    %1104 = vmatpush.bf16.msra.mxu0 %v988
    %1105 = vmatpush.bf16.msra.mxu0 %v986
    %1106 = vmatpush.bf16.msra.mxu0 %v984
    %1107 = vmatpush.bf16.msra.mxu0 %v982
    %1108 = vmatmul.bf16.gmra.mxu0 %v1098
    %v1109 = vpop.f32.mrf.mxu0
    %v1110 = vadd.f32 0.0, %v1109
    %v1111 = vpop.f32.mrf.mxu0
    %1112 = vdwg.mxu0
    %1113 = vmatpush.bf16.msra.mxu0 %v1012
    %1114 = vmatpush.bf16.msra.mxu0 %v1010
    %1115 = vmatpush.bf16.msra.mxu0 %v1008
    %1116 = vmatpush.bf16.msra.mxu0 %v1006
    %1117 = vmatpush.bf16.msra.mxu0 %v1004
    %1118 = vmatpush.bf16.msra.mxu0 %v1002
    %1119 = vmatpush.bf16.msra.mxu0 %v1000
    %1120 = vmatpush.bf16.msra.mxu0 %v998
    %1121 = vmatmul.bf16.gmra.mxu0 %v1099
    %v1122 = vpop.f32.mrf.mxu0
    %v1123 = vadd.f32 %v1110, %v1122
    %v1124 = vpop.f32.mrf.mxu0
    %1125 = vdwg.mxu0
    %1126 = vmatpush.bf16.msra.mxu0 %v997
    %1127 = vmatpush.bf16.msra.mxu0 %v995
    %1128 = vmatpush.bf16.msra.mxu0 %v993
    %1129 = vmatpush.bf16.msra.mxu0 %v991
    %1130 = vmatpush.bf16.msra.mxu0 %v989
    %1131 = vmatpush.bf16.msra.mxu0 %v987
    %1132 = vmatpush.bf16.msra.mxu0 %v985
    %1133 = vmatpush.bf16.msra.mxu0 %v983
    %1134 = vmatmul.bf16.gmra.mxu0 %v1098
    %v1135 = vpop.f32.mrf.mxu0
    %v1136 = vadd.f32 0.0, %v1135
    %v1137 = vpop.f32.mrf.mxu0
    %1138 = vdwg.mxu0
    %1139 = vmatpush.bf16.msra.mxu0 %v1013
    %1140 = vmatpush.bf16.msra.mxu0 %v1011
    %1141 = vmatpush.bf16.msra.mxu0 %v1009
    %1142 = vmatpush.bf16.msra.mxu0 %v1007
    %1143 = vmatpush.bf16.msra.mxu0 %v1005
    %1144 = vmatpush.bf16.msra.mxu0 %v1003
    %1145 = vmatpush.bf16.msra.mxu0 %v1001
    %1146 = vmatpush.bf16.msra.mxu0 %v999
    %1147 = vmatmul.bf16.gmra.mxu0 %v1099
    %v1148 = vpop.f32.mrf.mxu0
    %v1149 = vadd.f32 %v1136, %v1148
    %v1150 = vpop.f32.mrf.mxu0
    %1151 = vdwg.mxu0
    %v1152 = vpack.c.bf16 %v847, %v847
    %v1153 = vpack.c.bf16 %v848, %v848
    %1154 = vmatpush.bf16.msra.mxu0 %v996
    %1155 = vmatpush.bf16.msra.mxu0 %v994
    %1156 = vmatpush.bf16.msra.mxu0 %v992
    %1157 = vmatpush.bf16.msra.mxu0 %v990
    %1158 = vmatpush.bf16.msra.mxu0 %v988
    %1159 = vmatpush.bf16.msra.mxu0 %v986
    %1160 = vmatpush.bf16.msra.mxu0 %v984
    %1161 = vmatpush.bf16.msra.mxu0 %v982
    %1162 = vmatmul.bf16.gmra.mxu0 %v1152
    %v1163 = vpop.f32.mrf.mxu0
    %v1164 = vadd.f32 0.0, %v1163
    %v1165 = vpop.f32.mrf.mxu0
    %1166 = vdwg.mxu0
    %1167 = vmatpush.bf16.msra.mxu0 %v1012
    %1168 = vmatpush.bf16.msra.mxu0 %v1010
    %1169 = vmatpush.bf16.msra.mxu0 %v1008
    %1170 = vmatpush.bf16.msra.mxu0 %v1006
    %1171 = vmatpush.bf16.msra.mxu0 %v1004
    %1172 = vmatpush.bf16.msra.mxu0 %v1002
    %1173 = vmatpush.bf16.msra.mxu0 %v1000
    %1174 = vmatpush.bf16.msra.mxu0 %v998
    %1175 = vmatmul.bf16.gmra.mxu0 %v1153
    %v1176 = vpop.f32.mrf.mxu0
    %v1177 = vadd.f32 %v1164, %v1176
    %v1178 = vpop.f32.mrf.mxu0
    %1179 = vdwg.mxu0
    %1180 = vmatpush.bf16.msra.mxu0 %v997
    %1181 = vmatpush.bf16.msra.mxu0 %v995
    %1182 = vmatpush.bf16.msra.mxu0 %v993
    %1183 = vmatpush.bf16.msra.mxu0 %v991
    %1184 = vmatpush.bf16.msra.mxu0 %v989
    %1185 = vmatpush.bf16.msra.mxu0 %v987
    %1186 = vmatpush.bf16.msra.mxu0 %v985
    %1187 = vmatpush.bf16.msra.mxu0 %v983
    %1188 = vmatmul.bf16.gmra.mxu0 %v1152
    %v1189 = vpop.f32.mrf.mxu0
    %v1190 = vadd.f32 0.0, %v1189
    %v1191 = vpop.f32.mrf.mxu0
    %1192 = vdwg.mxu0
    %1193 = vmatpush.bf16.msra.mxu0 %v1013
    %1194 = vmatpush.bf16.msra.mxu0 %v1011
    %1195 = vmatpush.bf16.msra.mxu0 %v1009
    %1196 = vmatpush.bf16.msra.mxu0 %v1007
    %1197 = vmatpush.bf16.msra.mxu0 %v1005
    %1198 = vmatpush.bf16.msra.mxu0 %v1003
    %1199 = vmatpush.bf16.msra.mxu0 %v1001
    %1200 = vmatpush.bf16.msra.mxu0 %v999
    %1201 = vmatmul.bf16.gmra.mxu0 %v1153
    %v1202 = vpop.f32.mrf.mxu0
    %v1203 = vadd.f32 %v1190, %v1202
    %v1204 = vpop.f32.mrf.mxu0
    %1205 = vdwg.mxu0
    %v1206 = vpack.c.bf16 %v849, %v849
    %v1207 = vpack.c.bf16 %v850, %v850
    %1208 = vmatpush.bf16.msra.mxu0 %v996
    %1209 = vmatpush.bf16.msra.mxu0 %v994
    %1210 = vmatpush.bf16.msra.mxu0 %v992
    %1211 = vmatpush.bf16.msra.mxu0 %v990
    %1212 = vmatpush.bf16.msra.mxu0 %v988
    %1213 = vmatpush.bf16.msra.mxu0 %v986
    %1214 = vmatpush.bf16.msra.mxu0 %v984
    %1215 = vmatpush.bf16.msra.mxu0 %v982
    %1216 = vmatmul.bf16.gmra.mxu0 %v1206
    %v1217 = vpop.f32.mrf.mxu0
    %v1218 = vadd.f32 0.0, %v1217
    %v1219 = vpop.f32.mrf.mxu0
    %1220 = vdwg.mxu0
    %1221 = vmatpush.bf16.msra.mxu0 %v1012
    %1222 = vmatpush.bf16.msra.mxu0 %v1010
    %1223 = vmatpush.bf16.msra.mxu0 %v1008
    %1224 = vmatpush.bf16.msra.mxu0 %v1006
    %1225 = vmatpush.bf16.msra.mxu0 %v1004
    %1226 = vmatpush.bf16.msra.mxu0 %v1002
    %1227 = vmatpush.bf16.msra.mxu0 %v1000
    %1228 = vmatpush.bf16.msra.mxu0 %v998
    %1229 = vmatmul.bf16.gmra.mxu0 %v1207
    %v1230 = vpop.f32.mrf.mxu0
    %v1231 = vadd.f32 %v1218, %v1230
    %v1232 = vpop.f32.mrf.mxu0
    %1233 = vdwg.mxu0
    %1234 = vmatpush.bf16.msra.mxu0 %v997
    %1235 = vmatpush.bf16.msra.mxu0 %v995
    %1236 = vmatpush.bf16.msra.mxu0 %v993
    %1237 = vmatpush.bf16.msra.mxu0 %v991
    %1238 = vmatpush.bf16.msra.mxu0 %v989
    %1239 = vmatpush.bf16.msra.mxu0 %v987
    %1240 = vmatpush.bf16.msra.mxu0 %v985
    %1241 = vmatpush.bf16.msra.mxu0 %v983
    %1242 = vmatmul.bf16.gmra.mxu0 %v1206
    %v1243 = vpop.f32.mrf.mxu0
    %v1244 = vadd.f32 0.0, %v1243
    %v1245 = vpop.f32.mrf.mxu0
    %1246 = vdwg.mxu0
    %1247 = vmatpush.bf16.msra.mxu0 %v1013
    %1248 = vmatpush.bf16.msra.mxu0 %v1011
    %1249 = vmatpush.bf16.msra.mxu0 %v1009
    %1250 = vmatpush.bf16.msra.mxu0 %v1007
    %1251 = vmatpush.bf16.msra.mxu0 %v1005
    %1252 = vmatpush.bf16.msra.mxu0 %v1003
    %1253 = vmatpush.bf16.msra.mxu0 %v1001
    %1254 = vmatpush.bf16.msra.mxu0 %v999
    %1255 = vmatmul.bf16.gmra.mxu0 %v1207
    %v1256 = vpop.f32.mrf.mxu0
    %v1257 = vadd.f32 %v1244, %v1256
    %v1258 = vpop.f32.mrf.mxu0
    %1259 = vdwg.mxu0
    %v1261 = vperm.slane %v883, 0
    %v1262 = vperm.slane %v883, 1
    %v1263 = vperm.slane %v883, 2
    %v1264 = vperm.slane %v883, 3
    %v1265 = vperm.slane %v883, 4
    %v1266 = vperm.slane %v883, 5
    %v1267 = vperm.slane %v883, 6
    %v1268 = vperm.slane %v883, 7
    %v1277 = vadd.f32 %v1069, %v1261
    %v1278 = vadd.f32 %v1095, %v1262
    %v1279 = vadd.f32 %v1123, %v1263
    %v1280 = vadd.f32 %v1149, %v1264
    %v1281 = vadd.f32 %v1177, %v1265
    %v1282 = vadd.f32 %v1203, %v1266
    %v1283 = vadd.f32 %v1231, %v1267
    %v1284 = vadd.f32 %v1257, %v1268
    %v1285 = vsub.f32 0.0, %v1277
    %v1286 = vsub.f32 0.0, %v1278
    %v1287 = vsub.f32 0.0, %v1279
    %v1288 = vsub.f32 0.0, %v1280
    %v1289 = vsub.f32 0.0, %v1281
    %v1290 = vsub.f32 0.0, %v1282
    %v1291 = vsub.f32 0.0, %v1283
    %v1292 = vsub.f32 0.0, %v1284
    %v1293 = vmul.f32 %v1285, 1.442695
    %v1294 = vpow.pop %v1293
    %v1295 = vmul.f32 %v1286, 1.442695
    %v1296 = vpow.pop %v1295
    %v1297 = vmul.f32 %v1287, 1.442695
    %v1298 = vpow.pop %v1297
    %v1299 = vmul.f32 %v1288, 1.442695
    %v1300 = vpow.pop %v1299
    %v1301 = vmul.f32 %v1289, 1.442695
    %v1302 = vpow.pop %v1301
    %v1303 = vmul.f32 %v1290, 1.442695
    %v1304 = vpow.pop %v1303
    %v1305 = vmul.f32 %v1291, 1.442695
    %v1306 = vpow.pop %v1305
    %v1307 = vmul.f32 %v1292, 1.442695
    %v1308 = vpow.pop %v1307
    %v1309 = vadd.f32 %v1294, 1.0
    %v1310 = vadd.f32 %v1296, 1.0
    %v1311 = vadd.f32 %v1298, 1.0
    %v1312 = vadd.f32 %v1300, 1.0
    %v1313 = vadd.f32 %v1302, 1.0
    %v1314 = vadd.f32 %v1304, 1.0
    %v1315 = vadd.f32 %v1306, 1.0
    %v1316 = vadd.f32 %v1308, 1.0
    %v1317 = vrcp.pop %v1309
    %v1318 = vrcp.pop %v1310
    %v1319 = vrcp.pop %v1311
    %v1320 = vrcp.pop %v1312
    %v1321 = vrcp.pop %v1313
    %v1322 = vrcp.pop %v1314
    %v1323 = vrcp.pop %v1315
    %v1324 = vrcp.pop %v1316
    %v1333 = vrot.slane %v1318, 6
    %v1334 = vrot.slane %v1319, 4
    %v1335 = vrot.slane %v1320, 2
    %v1336 = vrot.slane %v1322, 6
    %v1337 = vrot.slane %v1323, 4
    %v1338 = vrot.slane %v1324, 2
    %vm1339 = vcmask 1041408
    %v1340 = vsel %vm1339, %v1317, %v1333
    %vm1341 = vcmask 1045508
    %v1342 = vsel %vm1341, %v1334, %v1335
    %vm1343 = vcmask 1043456
    %v1344 = vsel %vm1343, %v1340, %v1342
    %v1345 = vsel %vm1339, %v1321, %v1336
    %v1346 = vsel %vm1341, %v1337, %v1338
    %v1347 = vsel %vm1343, %v1345, %v1346
    %1350 = vst [vmem:[#allocation14] sm:$0xff] %v1344
    %1351 = vst [vmem:[#allocation14 + $0x8] sm:$0xff] %v1347
    // Predicated region
    $region58: #{tpu_custom_call.1} parent=1 // pred_check
      _
    $region59: #{tpu_custom_call.1} parent=1 // pred_check_branch
      %1353 = sbr.rel (0) target = $region61
    $region60: #{tpu_custom_call.1} parent=1 // pred_region
      %1355 = vsyncadd [#allocation4], 0
      %s1357 = sshll.u32 [#allocation14], 4
      %s1358 = int_to_ptr.vmem [resolvable:$true] %s1357
      %s1359 = sshll.u32 %s7, 4
      %s1360 = int_to_ptr.hbm [resolvable:$true] %s1359
      %1362 = dma.vmem_to_hbm [thread:$0]  %s1358, 256, %s1360, [#allocation4]
    $region61: #{tpu_custom_call.1} parent=1 // pred_fallthru
      _
    // Predicated region
    $region62: #{tpu_custom_call.1} parent=1 // pred_check
      _
    $region63: #{tpu_custom_call.1} parent=1 // pred_check_branch
      %1364 = sbr.rel (0) target = $region65
    $region64: #{tpu_custom_call.1} parent=1 // pred_region
      %1366 = dma.done [#allocation4], 256
    $region65: #{tpu_custom_call.1} parent=1 // pred_fallthru
      _
    %1367 = vsyncpa [#allocation3], 1
    %1368 = vsyncpa [#allocation6], 1
    %1369 = vsyncpa [#allocation9], 1
    %1370 = vsyncpa [#allocation12], 1
    %1371 = vsyncpa [#allocation4], 1

// kernel: tpu_custom_call.1
$region0: #{tpu_custom_call.1}
  #allocation0 [shape = 'u32[]', space=smem, size = 0x4, offset = 0x4, fixed_abs, tag = 'smem constant byte address 0x4 - core index']
  #allocation1 [shape = 'u32[72,128]{1,0:T(1,128)}', space=vmem, size = 0x9000, scoped, tag = 'internal scratch']
  %s0 = inlined_call_operand.hbm [shape: f32[2,16], index: 0, kind: input, shape index: {}]
  %s1 = inlined_call_operand.hbm [shape: bf16[16,512], index: 1, kind: input, shape index: {}]
  %s2 = inlined_call_operand.hbm [shape: f32[1,512], index: 2, kind: input, shape index: {}]
  %s3 = inlined_call_operand.hbm [shape: bf16[256,512], index: 3, kind: input, shape index: {}]
  %s4 = inlined_call_operand.hbm [shape: f32[1,1024], index: 4, kind: input, shape index: {}]
  %s5 = inlined_call_operand.hbm [shape: bf16[256,256], index: 5, kind: input, shape index: {}]
  %s6 = inlined_call_operand.hbm [shape: f32[1,1024], index: 6, kind: input, shape index: {}]
  %s7 = inlined_call_operand.hbm [shape: f32[2,1024], index: 7, kind: output, shape index: {}]
  %s8 = sld [smem:[#allocation0]]
  $region66: #{tpu_custom_call.1} parent=0
    _
  %s10 = ssub.s32 1, %s8
  %s11 = scalar_select 0, %s10, %s8
  $region1: #{tpu_custom_call.1} parent=0
    #allocation2 [shape = 'u8[1024]{0}', space=vmem, size = 0x400, scoped, tag = 'input window, operand 0, single buffered']
    #allocation3 [shape = 's32[1]{0}', space=sflag, size = 0x4, scoped, tag = 'scoped memory for tpu_custom_call.1']
    #allocation4 [shape = 's32[1]{0}', space=sflag, size = 0x4, scoped, tag = 'scoped memory for tpu_custom_call.1']
    #allocation5 [shape = 'u8[16384]{0}', space=vmem, size = 0x4000, scoped, tag = 'input window, operand 1, single buffered']
    #allocation6 [shape = 's32[1]{0}', space=sflag, size = 0x4, scoped, tag = 'scoped memory for tpu_custom_call.1']
    #allocation7 [shape = 'u8[2048]{0}', space=vmem, size = 0x800, scoped, tag = 'input window, operand 2, single buffered']
    #allocation8 [shape = 'u8[262144]{0}', space=vmem, size = 0x40000, scoped, tag = 'input window, operand 3, single buffered']
    #allocation9 [shape = 's32[1]{0}', space=sflag, size = 0x4, scoped, tag = 'scoped memory for tpu_custom_call.1']
    #allocation10 [shape = 'u8[4096]{0}', space=vmem, size = 0x1000, scoped, tag = 'input window, operand 4, single buffered']
    #allocation11 [shape = 'u8[131072]{0}', space=vmem, size = 0x20000, scoped, tag = 'input window, operand 5, single buffered']
    #allocation12 [shape = 's32[1]{0}', space=sflag, size = 0x4, scoped, tag = 'scoped memory for tpu_custom_call.1']
    #allocation13 [shape = 'u8[4096]{0}', space=vmem, size = 0x1000, scoped, tag = 'input window, operand 6, single buffered']
    #allocation14 [shape = 'u8[8192]{0}', space=vmem, size = 0x2000, scoped, tag = 'output window, operand 0, single buffered']
    %12 = vsyncpa [#allocation3], 0
    %13 = vsyncpa [#allocation6], 0
    %14 = vsyncpa [#allocation9], 0
    %15 = vsyncpa [#allocation12], 0
    %16 = vsyncpa [#allocation4], 0
    // Predicated region
    $region2: #{tpu_custom_call.1} parent=1 // pred_check
      _
    $region3: #{tpu_custom_call.1} parent=1 // pred_check_branch
      %18 = sbr.rel (0) target = $region5
    $region4: #{tpu_custom_call.1} parent=1 // pred_region
      %20 = vsyncadd [#allocation3], 0
      %s22 = sshll.u32 %s0, 4
      %s23 = int_to_ptr.hbm [resolvable:$true] %s22
      %s24 = sshll.u32 [#allocation2], 4
      %s25 = int_to_ptr.vmem [resolvable:$true] %s24
      %27 = dma.hbm_to_vmem [thread:$0]  %s23, 32, %s25, [#allocation3]
    $region5: #{tpu_custom_call.1} parent=1 // pred_fallthru
      _
    // Predicated region
    $region6: #{tpu_custom_call.1} parent=1 // pred_check
      _
    $region7: #{tpu_custom_call.1} parent=1 // pred_check_branch
      %29 = sbr.rel (0) target = $region9
    $region8: #{tpu_custom_call.1} parent=1 // pred_region
      %31 = vsyncadd [#allocation6], 0
      %s32 = sshll.u32 %s1, 4
      %s33 = int_to_ptr.hbm [resolvable:$true] %s32
      %s34 = sshll.u32 [#allocation5], 4
      %s35 = int_to_ptr.vmem [resolvable:$true] %s34
      %40 = dma.hbm_to_vmem [thread:$0]  %s33, 512, %s35, [#allocation6], 256, 256, 16
    $region9: #{tpu_custom_call.1} parent=1 // pred_fallthru
      _
    // Predicated region
    $region10: #{tpu_custom_call.1} parent=1 // pred_check
      _
    $region11: #{tpu_custom_call.1} parent=1 // pred_check_branch
      %42 = sbr.rel (0) target = $region13
    $region12: #{tpu_custom_call.1} parent=1 // pred_region
      %44 = vsyncadd [#allocation6], 0
      %s46 = sshll.u32 %s2, 4
      %s47 = int_to_ptr.hbm [resolvable:$true] %s46
      %s48 = sshll.u32 [#allocation7], 4
      %s49 = int_to_ptr.vmem [resolvable:$true] %s48
      %51 = dma.hbm_to_vmem [thread:$0]  %s47, 64, %s49, [#allocation6]
    $region13: #{tpu_custom_call.1} parent=1 // pred_fallthru
      _
    // Predicated region
    $region14: #{tpu_custom_call.1} parent=1 // pred_check
      _
    $region15: #{tpu_custom_call.1} parent=1 // pred_check_branch
      %53 = sbr.rel (0) target = $region17
    $region16: #{tpu_custom_call.1} parent=1 // pred_region
      %55 = vsyncadd [#allocation9], 0
      %s56 = sshll.u32 %s3, 4
      %s57 = int_to_ptr.hbm [resolvable:$true] %s56
      %s58 = sshll.u32 [#allocation8], 4
      %s59 = int_to_ptr.vmem [resolvable:$true] %s58
      %64 = dma.hbm_to_vmem [thread:$0]  %s57, 8192, %s59, [#allocation9], 256, 256, 16
    $region17: #{tpu_custom_call.1} parent=1 // pred_fallthru
      _
    // Predicated region
    $region18: #{tpu_custom_call.1} parent=1 // pred_check
      _
    $region19: #{tpu_custom_call.1} parent=1 // pred_check_branch
      %66 = sbr.rel (0) target = $region21
    $region20: #{tpu_custom_call.1} parent=1 // pred_region
      %68 = vsyncadd [#allocation9], 0
      %s70 = sshll.u32 %s4, 4
      %s71 = int_to_ptr.hbm [resolvable:$true] %s70
      %s72 = sshll.u32 [#allocation10], 4
      %s73 = int_to_ptr.vmem [resolvable:$true] %s72
      %75 = dma.hbm_to_vmem [thread:$0]  %s71, 128, %s73, [#allocation9]
    $region21: #{tpu_custom_call.1} parent=1 // pred_fallthru
      _
    // Predicated region
    $region22: #{tpu_custom_call.1} parent=1 // pred_check
      _
    $region23: #{tpu_custom_call.1} parent=1 // pred_check_branch
      %77 = sbr.rel (0) target = $region25
    $region24: #{tpu_custom_call.1} parent=1 // pred_region
      %79 = vsyncadd [#allocation12], 0
      %s80 = sshll.u32 %s5, 4
      %s81 = int_to_ptr.hbm [resolvable:$true] %s80
      %s82 = sshll.u32 [#allocation11], 4
      %s83 = int_to_ptr.vmem [resolvable:$true] %s82
      %88 = dma.hbm_to_vmem [thread:$0]  %s81, 4096, %s83, [#allocation12], 128, 128, 8
    $region25: #{tpu_custom_call.1} parent=1 // pred_fallthru
      _
    // Predicated region
    $region26: #{tpu_custom_call.1} parent=1 // pred_check
      _
    $region27: #{tpu_custom_call.1} parent=1 // pred_check_branch
      %90 = sbr.rel (0) target = $region29
    $region28: #{tpu_custom_call.1} parent=1 // pred_region
      %92 = vsyncadd [#allocation12], 0
      %s94 = sshll.u32 %s6, 4
      %s95 = int_to_ptr.hbm [resolvable:$true] %s94
      %s96 = sshll.u32 [#allocation13], 4
      %s97 = int_to_ptr.vmem [resolvable:$true] %s96
      %99 = dma.hbm_to_vmem [thread:$0]  %s95, 128, %s97, [#allocation12]
    $region29: #{tpu_custom_call.1} parent=1 // pred_fallthru
      _
    // Predicated region
    $region30: #{tpu_custom_call.1} parent=1 // pred_check
      _
    $region31: #{tpu_custom_call.1} parent=1 // pred_check_branch
      %101 = sbr.rel (0) target = $region33
    $region32: #{tpu_custom_call.1} parent=1 // pred_region
      %103 = dma.done [#allocation3], 32
    $region33: #{tpu_custom_call.1} parent=1 // pred_fallthru
      _
    // Predicated region
    $region34: #{tpu_custom_call.1} parent=1 // pred_check
      _
    $region35: #{tpu_custom_call.1} parent=1 // pred_check_branch
      %105 = sbr.rel (0) target = $region37
    $region36: #{tpu_custom_call.1} parent=1 // pred_region
      %107 = dma.done [#allocation6], 512
    $region37: #{tpu_custom_call.1} parent=1 // pred_fallthru
      _
    // Predicated region
    $region38: #{tpu_custom_call.1} parent=1 // pred_check
      _
    $region39: #{tpu_custom_call.1} parent=1 // pred_check_branch
      %109 = sbr.rel (0) target = $region41
    $region40: #{tpu_custom_call.1} parent=1 // pred_region
      %111 = dma.done [#allocation6], 64
    $region41: #{tpu_custom_call.1} parent=1 // pred_fallthru
      _
    // Predicated region
    $region42: #{tpu_custom_call.1} parent=1 // pred_check
      _
    $region43: #{tpu_custom_call.1} parent=1 // pred_check_branch
      %113 = sbr.rel (0) target = $region45
    $region44: #{tpu_custom_call.1} parent=1 // pred_region
      %115 = dma.done [#allocation9], 8192
    $region45: #{tpu_custom_call.1} parent=1 // pred_fallthru
      _
    // Predicated region
    $region46: #{tpu_custom_call.1} parent=1 // pred_check
      _
    $region47: #{tpu_custom_call.1} parent=1 // pred_check_branch
      %117 = sbr.rel (0) target = $region49
    $region48: #{tpu_custom_call.1} parent=1 // pred_region
      %119 = dma.done [#allocation9], 128
    $region49: #{tpu_custom_call.1} parent=1 // pred_fallthru
      _
    // Predicated region
    $region50: #{tpu_custom_call.1} parent=1 // pred_check
      _
    $region51: #{tpu_custom_call.1} parent=1 // pred_check_branch
      %121 = sbr.rel (0) target = $region53
    $region52: #{tpu_custom_call.1} parent=1 // pred_region
      %123 = dma.done [#allocation12], 4096
    $region53: #{tpu_custom_call.1} parent=1 // pred_fallthru
      _
    // Predicated region
    $region54: #{tpu_custom_call.1} parent=1 // pred_check
      _
    $region55: #{tpu_custom_call.1} parent=1 // pred_check_branch
      %125 = sbr.rel (0) target = $region57
    $region56: #{tpu_custom_call.1} parent=1 // pred_region
      %127 = dma.done [#allocation12], 128
    $region57: #{tpu_custom_call.1} parent=1 // pred_fallthru
      _
    %v129 = vld [vmem:[#allocation2] sm:$0x3]
    %v130 = vpack.c.bf16 %v129, %v129
    %v131 = vld [vmem:[#allocation5] sm:$0xff]
    %v132 = vld [vmem:[#allocation5 + $0x8] sm:$0xff]
    %v133 = vld [vmem:[#allocation5 + $0x10] sm:$0xff]
    %v134 = vld [vmem:[#allocation5 + $0x18] sm:$0xff]
    %v135 = vld [vmem:[#allocation7] sm:$0xf]
    %v137 = vperm.slane %v135, 0
    %v138 = vperm.slane %v135, 1
    %v139 = vperm.slane %v135, 2
    %v140 = vperm.slane %v135, 3
    %v149 = vunpack.c.l.b16 %v131
    %v150 = vunpack.c.h.b16 %v131
    %v151 = vunpack.c.l.b16 %v132
    %v152 = vunpack.c.h.b16 %v132
    %v153 = vunpack.c.l.b16 %v133
    %v154 = vunpack.c.h.b16 %v133
    %v155 = vunpack.c.l.b16 %v134
    %v156 = vunpack.c.h.b16 %v134
    %v157 = vpack.c.b16 %v153, %v149
    %v158 = vpack.c.b16 %v154, %v150
    %v159 = vpack.c.b16 %v155, %v151
    %v160 = vpack.c.b16 %v156, %v152
    %vm165 = vcmask 130048
    %v167 = vsel %vm165, %v130, 0
    %169 = vmatpush.bf16.msra.mxu0 0
    %170 = vmatpush.bf16.msra.mxu0 0
    %171 = vmatpush.bf16.msra.mxu0 0
    %172 = vmatpush.bf16.msra.mxu0 0
    %173 = vmatpush.bf16.msra.mxu0 0
    %174 = vmatpush.bf16.msra.mxu0 0
    %175 = vmatpush.bf16.msra.mxu0 0
    %176 = vmatpush.bf16.msra.mxu0 %v157
    %177 = vmatmul.bf16.gmra.mxu0 %v167
    %v178 = vpop.f32.mrf.mxu0
    %v179 = vadd.f32 %v137, %v178
    %v180 = vpop.f32.mrf.mxu0
    %181 = vdwg.mxu0
    %182 = vmatpush.bf16.msra.mxu0 0
    %183 = vmatpush.bf16.msra.mxu0 0
    %184 = vmatpush.bf16.msra.mxu0 0
    %185 = vmatpush.bf16.msra.mxu0 0
    %186 = vmatpush.bf16.msra.mxu0 0
    %187 = vmatpush.bf16.msra.mxu0 0
    %188 = vmatpush.bf16.msra.mxu0 0
    %189 = vmatpush.bf16.msra.mxu0 %v158
    %190 = vmatmul.bf16.gmra.mxu0 %v167
    %v191 = vpop.f32.mrf.mxu0
    %v192 = vadd.f32 %v138, %v191
    %v193 = vpop.f32.mrf.mxu0
    %194 = vdwg.mxu0
    %195 = vmatpush.bf16.msra.mxu0 0
    %196 = vmatpush.bf16.msra.mxu0 0
    %197 = vmatpush.bf16.msra.mxu0 0
    %198 = vmatpush.bf16.msra.mxu0 0
    %199 = vmatpush.bf16.msra.mxu0 0
    %200 = vmatpush.bf16.msra.mxu0 0
    %201 = vmatpush.bf16.msra.mxu0 0
    %202 = vmatpush.bf16.msra.mxu0 %v159
    %203 = vmatmul.bf16.gmra.mxu0 %v167
    %v204 = vpop.f32.mrf.mxu0
    %v205 = vadd.f32 %v139, %v204
    %v206 = vpop.f32.mrf.mxu0
    %207 = vdwg.mxu0
    %208 = vmatpush.bf16.msra.mxu0 0
    %209 = vmatpush.bf16.msra.mxu0 0
    %210 = vmatpush.bf16.msra.mxu0 0
    %211 = vmatpush.bf16.msra.mxu0 0
    %212 = vmatpush.bf16.msra.mxu0 0
    %213 = vmatpush.bf16.msra.mxu0 0
    %214 = vmatpush.bf16.msra.mxu0 0
    %215 = vmatpush.bf16.msra.mxu0 %v160
    %216 = vmatmul.bf16.gmra.mxu0 %v167
    %v217 = vpop.f32.mrf.mxu0
    %v218 = vadd.f32 %v140, %v217
    %v219 = vpop.f32.mrf.mxu0
    %220 = vdwg.mxu0
    %v221 = vld [vmem:[#allocation8] sm:$0xff]
    %v222 = vld [vmem:[#allocation8 + $0x8] sm:$0xff]
    %v223 = vld [vmem:[#allocation8 + $0x10] sm:$0xff]
    %v224 = vld [vmem:[#allocation8 + $0x18] sm:$0xff]
    %v225 = vld [vmem:[#allocation8 + $0x20] sm:$0xff]
    %v226 = vld [vmem:[#allocation8 + $0x28] sm:$0xff]
    %v227 = vld [vmem:[#allocation8 + $0x30] sm:$0xff]
    %v228 = vld [vmem:[#allocation8 + $0x38] sm:$0xff]
    %v229 = vld [vmem:[#allocation8 + $0x40] sm:$0xff]
    %v230 = vld [vmem:[#allocation8 + $0x48] sm:$0xff]
    %v231 = vld [vmem:[#allocation8 + $0x50] sm:$0xff]
    %v232 = vld [vmem:[#allocation8 + $0x58] sm:$0xff]
    %v233 = vld [vmem:[#allocation8 + $0x60] sm:$0xff]
    %v234 = vld [vmem:[#allocation8 + $0x68] sm:$0xff]
    %v235 = vld [vmem:[#allocation8 + $0x70] sm:$0xff]
    %v236 = vld [vmem:[#allocation8 + $0x78] sm:$0xff]
    %v237 = vld [vmem:[#allocation8 + $0x80] sm:$0xff]
    %v238 = vld [vmem:[#allocation8 + $0x88] sm:$0xff]
    %v239 = vld [vmem:[#allocation8 + $0x90] sm:$0xff]
    %v240 = vld [vmem:[#allocation8 + $0x98] sm:$0xff]
    %v241 = vld [vmem:[#allocation8 + $0xa0] sm:$0xff]
    %v242 = vld [vmem:[#allocation8 + $0xa8] sm:$0xff]
    %v243 = vld [vmem:[#allocation8 + $0xb0] sm:$0xff]
    %v244 = vld [vmem:[#allocation8 + $0xb8] sm:$0xff]
    %v245 = vld [vmem:[#allocation8 + $0xc0] sm:$0xff]
    %v246 = vld [vmem:[#allocation8 + $0xc8] sm:$0xff]
    %v247 = vld [vmem:[#allocation8 + $0xd0] sm:$0xff]
    %v248 = vld [vmem:[#allocation8 + $0xd8] sm:$0xff]
    %v249 = vld [vmem:[#allocation8 + $0xe0] sm:$0xff]
    %v250 = vld [vmem:[#allocation8 + $0xe8] sm:$0xff]
    %v251 = vld [vmem:[#allocation8 + $0xf0] sm:$0xff]
    %v252 = vld [vmem:[#allocation8 + $0xf8] sm:$0xff]
    %v253 = vld [vmem:[#allocation8 + $0x100] sm:$0xff]
    %v254 = vld [vmem:[#allocation8 + $0x108] sm:$0xff]
    %v255 = vld [vmem:[#allocation8 + $0x110] sm:$0xff]
    %v256 = vld [vmem:[#allocation8 + $0x118] sm:$0xff]
    %v257 = vld [vmem:[#allocation8 + $0x120] sm:$0xff]
    %v258 = vld [vmem:[#allocation8 + $0x128] sm:$0xff]
    %v259 = vld [vmem:[#allocation8 + $0x130] sm:$0xff]
    %v260 = vld [vmem:[#allocation8 + $0x138] sm:$0xff]
    %v261 = vld [vmem:[#allocation8 + $0x140] sm:$0xff]
    %v262 = vld [vmem:[#allocation8 + $0x148] sm:$0xff]
    %v263 = vld [vmem:[#allocation8 + $0x150] sm:$0xff]
    %v264 = vld [vmem:[#allocation8 + $0x158] sm:$0xff]
    %v265 = vld [vmem:[#allocation8 + $0x160] sm:$0xff]
    %v266 = vld [vmem:[#allocation8 + $0x168] sm:$0xff]
    %v267 = vld [vmem:[#allocation8 + $0x170] sm:$0xff]
    %v268 = vld [vmem:[#allocation8 + $0x178] sm:$0xff]
    %v269 = vld [vmem:[#allocation8 + $0x180] sm:$0xff]
    %v270 = vld [vmem:[#allocation8 + $0x188] sm:$0xff]
    %v271 = vld [vmem:[#allocation8 + $0x190] sm:$0xff]
    %v272 = vld [vmem:[#allocation8 + $0x198] sm:$0xff]
    %v273 = vld [vmem:[#allocation8 + $0x1a0] sm:$0xff]
    %v274 = vld [vmem:[#allocation8 + $0x1a8] sm:$0xff]
    %v275 = vld [vmem:[#allocation8 + $0x1b0] sm:$0xff]
    %v276 = vld [vmem:[#allocation8 + $0x1b8] sm:$0xff]
    %v277 = vld [vmem:[#allocation8 + $0x1c0] sm:$0xff]
    %v278 = vld [vmem:[#allocation8 + $0x1c8] sm:$0xff]
    %v279 = vld [vmem:[#allocation8 + $0x1d0] sm:$0xff]
    %v280 = vld [vmem:[#allocation8 + $0x1d8] sm:$0xff]
    %v281 = vld [vmem:[#allocation8 + $0x1e0] sm:$0xff]
    %v282 = vld [vmem:[#allocation8 + $0x1e8] sm:$0xff]
    %v283 = vld [vmem:[#allocation8 + $0x1f0] sm:$0xff]
    %v284 = vld [vmem:[#allocation8 + $0x1f8] sm:$0xff]
    %v285 = vld [vmem:[#allocation10] sm:$0xff]
    %v286 = vpack.c.bf16 %v179, %v179
    %v287 = vpack.c.bf16 %v192, %v192
    %v352 = vunpack.c.l.b16 %v221
    %v353 = vunpack.c.h.b16 %v221
    %v354 = vunpack.c.l.b16 %v222
    %v355 = vunpack.c.h.b16 %v222
    %v356 = vunpack.c.l.b16 %v223
    %v357 = vunpack.c.h.b16 %v223
    %v358 = vunpack.c.l.b16 %v224
    %v359 = vunpack.c.h.b16 %v224
    %v360 = vunpack.c.l.b16 %v225
    %v361 = vunpack.c.h.b16 %v225
    %v362 = vunpack.c.l.b16 %v226
    %v363 = vunpack.c.h.b16 %v226
    %v364 = vunpack.c.l.b16 %v227
    %v365 = vunpack.c.h.b16 %v227
    %v366 = vunpack.c.l.b16 %v228
    %v367 = vunpack.c.h.b16 %v228
    %v368 = vunpack.c.l.b16 %v229
    %v369 = vunpack.c.h.b16 %v229
    %v370 = vunpack.c.l.b16 %v230
    %v371 = vunpack.c.h.b16 %v230
    %v372 = vunpack.c.l.b16 %v231
    %v373 = vunpack.c.h.b16 %v231
    %v374 = vunpack.c.l.b16 %v232
    %v375 = vunpack.c.h.b16 %v232
    %v376 = vunpack.c.l.b16 %v233
    %v377 = vunpack.c.h.b16 %v233
    %v378 = vunpack.c.l.b16 %v234
    %v379 = vunpack.c.h.b16 %v234
    %v380 = vunpack.c.l.b16 %v235
    %v381 = vunpack.c.h.b16 %v235
    %v382 = vunpack.c.l.b16 %v236
    %v383 = vunpack.c.h.b16 %v236
    %v384 = vunpack.c.l.b16 %v237
    %v385 = vunpack.c.h.b16 %v237
    %v386 = vunpack.c.l.b16 %v238
    %v387 = vunpack.c.h.b16 %v238
    %v388 = vunpack.c.l.b16 %v239
    %v389 = vunpack.c.h.b16 %v239
    %v390 = vunpack.c.l.b16 %v240
    %v391 = vunpack.c.h.b16 %v240
    %v392 = vunpack.c.l.b16 %v241
    %v393 = vunpack.c.h.b16 %v241
    %v394 = vunpack.c.l.b16 %v242
    %v395 = vunpack.c.h.b16 %v242
    %v396 = vunpack.c.l.b16 %v243
    %v397 = vunpack.c.h.b16 %v243
    %v398 = vunpack.c.l.b16 %v244
    %v399 = vunpack.c.h.b16 %v244
    %v400 = vunpack.c.l.b16 %v245
    %v401 = vunpack.c.h.b16 %v245
    %v402 = vunpack.c.l.b16 %v246
    %v403 = vunpack.c.h.b16 %v246
    %v404 = vunpack.c.l.b16 %v247
    %v405 = vunpack.c.h.b16 %v247
    %v406 = vunpack.c.l.b16 %v248
    %v407 = vunpack.c.h.b16 %v248
    %v408 = vunpack.c.l.b16 %v249
    %v409 = vunpack.c.h.b16 %v249
    %v410 = vunpack.c.l.b16 %v250
    %v411 = vunpack.c.h.b16 %v250
    %v412 = vunpack.c.l.b16 %v251
    %v413 = vunpack.c.h.b16 %v251
    %v414 = vunpack.c.l.b16 %v252
    %v415 = vunpack.c.h.b16 %v252
    %v416 = vunpack.c.l.b16 %v253
    %v417 = vunpack.c.h.b16 %v253
    %v418 = vunpack.c.l.b16 %v254
    %v419 = vunpack.c.h.b16 %v254
    %v420 = vunpack.c.l.b16 %v255
    %v421 = vunpack.c.h.b16 %v255
    %v422 = vunpack.c.l.b16 %v256
    %v423 = vunpack.c.h.b16 %v256
    %v424 = vunpack.c.l.b16 %v257
    %v425 = vunpack.c.h.b16 %v257
    %v426 = vunpack.c.l.b16 %v258
    %v427 = vunpack.c.h.b16 %v258
    %v428 = vunpack.c.l.b16 %v259
    %v429 = vunpack.c.h.b16 %v259
    %v430 = vunpack.c.l.b16 %v260
    %v431 = vunpack.c.h.b16 %v260
    %v432 = vunpack.c.l.b16 %v261
    %v433 = vunpack.c.h.b16 %v261
    %v434 = vunpack.c.l.b16 %v262
    %v435 = vunpack.c.h.b16 %v262
    %v436 = vunpack.c.l.b16 %v263
    %v437 = vunpack.c.h.b16 %v263
    %v438 = vunpack.c.l.b16 %v264
    %v439 = vunpack.c.h.b16 %v264
    %v440 = vunpack.c.l.b16 %v265
    %v441 = vunpack.c.h.b16 %v265
    %v442 = vunpack.c.l.b16 %v266
    %v443 = vunpack.c.h.b16 %v266
    %v444 = vunpack.c.l.b16 %v267
    %v445 = vunpack.c.h.b16 %v267
    %v446 = vunpack.c.l.b16 %v268
    %v447 = vunpack.c.h.b16 %v268
    %v448 = vunpack.c.l.b16 %v269
    %v449 = vunpack.c.h.b16 %v269
    %v450 = vunpack.c.l.b16 %v270
    %v451 = vunpack.c.h.b16 %v270
    %v452 = vunpack.c.l.b16 %v271
    %v453 = vunpack.c.h.b16 %v271
    %v454 = vunpack.c.l.b16 %v272
    %v455 = vunpack.c.h.b16 %v272
    %v456 = vunpack.c.l.b16 %v273
    %v457 = vunpack.c.h.b16 %v273
    %v458 = vunpack.c.l.b16 %v274
    %v459 = vunpack.c.h.b16 %v274
    %v460 = vunpack.c.l.b16 %v275
    %v461 = vunpack.c.h.b16 %v275
    %v462 = vunpack.c.l.b16 %v276
    %v463 = vunpack.c.h.b16 %v276
    %v464 = vunpack.c.l.b16 %v277
    %v465 = vunpack.c.h.b16 %v277
    %v466 = vunpack.c.l.b16 %v278
    %v467 = vunpack.c.h.b16 %v278
    %v468 = vunpack.c.l.b16 %v279
    %v469 = vunpack.c.h.b16 %v279
    %v470 = vunpack.c.l.b16 %v280
    %v471 = vunpack.c.h.b16 %v280
    %v472 = vunpack.c.l.b16 %v281
    %v473 = vunpack.c.h.b16 %v281
    %v474 = vunpack.c.l.b16 %v282
    %v475 = vunpack.c.h.b16 %v282
    %v476 = vunpack.c.l.b16 %v283
    %v477 = vunpack.c.h.b16 %v283
    %v478 = vunpack.c.l.b16 %v284
    %v479 = vunpack.c.h.b16 %v284
    %v480 = vpack.c.b16 %v356, %v352
    %v481 = vpack.c.b16 %v357, %v353
    %v482 = vpack.c.b16 %v358, %v354
    %v483 = vpack.c.b16 %v359, %v355
    %v484 = vpack.c.b16 %v364, %v360
    %v485 = vpack.c.b16 %v365, %v361
    %v486 = vpack.c.b16 %v366, %v362
    %v487 = vpack.c.b16 %v367, %v363
    %v488 = vpack.c.b16 %v372, %v368
    %v489 = vpack.c.b16 %v373, %v369
    %v490 = vpack.c.b16 %v374, %v370
    %v491 = vpack.c.b16 %v375, %v371
    %v492 = vpack.c.b16 %v380, %v376
    %v493 = vpack.c.b16 %v381, %v377
    %v494 = vpack.c.b16 %v382, %v378
    %v495 = vpack.c.b16 %v383, %v379
    %v496 = vpack.c.b16 %v388, %v384
    %v497 = vpack.c.b16 %v389, %v385
    %v498 = vpack.c.b16 %v390, %v386
    %v499 = vpack.c.b16 %v391, %v387
    %v500 = vpack.c.b16 %v396, %v392
    %v501 = vpack.c.b16 %v397, %v393
    %v502 = vpack.c.b16 %v398, %v394
    %v503 = vpack.c.b16 %v399, %v395
    %v504 = vpack.c.b16 %v404, %v400
    %v505 = vpack.c.b16 %v405, %v401
    %v506 = vpack.c.b16 %v406, %v402
    %v507 = vpack.c.b16 %v407, %v403
    %v508 = vpack.c.b16 %v412, %v408
    %v509 = vpack.c.b16 %v413, %v409
    %v510 = vpack.c.b16 %v414, %v410
    %v511 = vpack.c.b16 %v415, %v411
    %v512 = vpack.c.b16 %v420, %v416
    %v513 = vpack.c.b16 %v421, %v417
    %v514 = vpack.c.b16 %v422, %v418
    %v515 = vpack.c.b16 %v423, %v419
    %v516 = vpack.c.b16 %v428, %v424
    %v517 = vpack.c.b16 %v429, %v425
    %v518 = vpack.c.b16 %v430, %v426
    %v519 = vpack.c.b16 %v431, %v427
    %v520 = vpack.c.b16 %v436, %v432
    %v521 = vpack.c.b16 %v437, %v433
    %v522 = vpack.c.b16 %v438, %v434
    %v523 = vpack.c.b16 %v439, %v435
    %v524 = vpack.c.b16 %v444, %v440
    %v525 = vpack.c.b16 %v445, %v441
    %v526 = vpack.c.b16 %v446, %v442
    %v527 = vpack.c.b16 %v447, %v443
    %v528 = vpack.c.b16 %v452, %v448
    %v529 = vpack.c.b16 %v453, %v449
    %v530 = vpack.c.b16 %v454, %v450
    %v531 = vpack.c.b16 %v455, %v451
    %v532 = vpack.c.b16 %v460, %v456
    %v533 = vpack.c.b16 %v461, %v457
    %v534 = vpack.c.b16 %v462, %v458
    %v535 = vpack.c.b16 %v463, %v459
    %v536 = vpack.c.b16 %v468, %v464
    %v537 = vpack.c.b16 %v469, %v465
    %v538 = vpack.c.b16 %v470, %v466
    %v539 = vpack.c.b16 %v471, %v467
    %v540 = vpack.c.b16 %v476, %v472
    %v541 = vpack.c.b16 %v477, %v473
    %v542 = vpack.c.b16 %v478, %v474
    %v543 = vpack.c.b16 %v479, %v475
    %608 = vmatpush.bf16.msra.mxu0 %v508
    %609 = vmatpush.bf16.msra.mxu0 %v504
    %610 = vmatpush.bf16.msra.mxu0 %v500
    %611 = vmatpush.bf16.msra.mxu0 %v496
    %612 = vmatpush.bf16.msra.mxu0 %v492
    %613 = vmatpush.bf16.msra.mxu0 %v488
    %614 = vmatpush.bf16.msra.mxu0 %v484
    %615 = vmatpush.bf16.msra.mxu0 %v480
    %616 = vmatmul.bf16.gmra.mxu0 %v286
    %v617 = vpop.f32.mrf.mxu0
    %v618 = vadd.f32 0.0, %v617
    %v619 = vpop.f32.mrf.mxu0
    %620 = vdwg.mxu0
    %621 = vmatpush.bf16.msra.mxu0 %v540
    %622 = vmatpush.bf16.msra.mxu0 %v536
    %623 = vmatpush.bf16.msra.mxu0 %v532
    %624 = vmatpush.bf16.msra.mxu0 %v528
    %625 = vmatpush.bf16.msra.mxu0 %v524
    %626 = vmatpush.bf16.msra.mxu0 %v520
    %627 = vmatpush.bf16.msra.mxu0 %v516
    %628 = vmatpush.bf16.msra.mxu0 %v512
    %629 = vmatmul.bf16.gmra.mxu0 %v287
    %v630 = vpop.f32.mrf.mxu0
    %v631 = vadd.f32 %v618, %v630
    %v632 = vpop.f32.mrf.mxu0
    %633 = vdwg.mxu0
    %634 = vmatpush.bf16.msra.mxu0 %v509
    %635 = vmatpush.bf16.msra.mxu0 %v505
    %636 = vmatpush.bf16.msra.mxu0 %v501
    %637 = vmatpush.bf16.msra.mxu0 %v497
    %638 = vmatpush.bf16.msra.mxu0 %v493
    %639 = vmatpush.bf16.msra.mxu0 %v489
    %640 = vmatpush.bf16.msra.mxu0 %v485
    %641 = vmatpush.bf16.msra.mxu0 %v481
    %642 = vmatmul.bf16.gmra.mxu0 %v286
    %v643 = vpop.f32.mrf.mxu0
    %v644 = vadd.f32 0.0, %v643
    %v645 = vpop.f32.mrf.mxu0
    %646 = vdwg.mxu0
    %647 = vmatpush.bf16.msra.mxu0 %v541
    %648 = vmatpush.bf16.msra.mxu0 %v537
    %649 = vmatpush.bf16.msra.mxu0 %v533
    %650 = vmatpush.bf16.msra.mxu0 %v529
    %651 = vmatpush.bf16.msra.mxu0 %v525
    %652 = vmatpush.bf16.msra.mxu0 %v521
    %653 = vmatpush.bf16.msra.mxu0 %v517
    %654 = vmatpush.bf16.msra.mxu0 %v513
    %655 = vmatmul.bf16.gmra.mxu0 %v287
    %v656 = vpop.f32.mrf.mxu0
    %v657 = vadd.f32 %v644, %v656
    %v658 = vpop.f32.mrf.mxu0
    %659 = vdwg.mxu0
    %660 = vmatpush.bf16.msra.mxu0 %v510
    %661 = vmatpush.bf16.msra.mxu0 %v506
    %662 = vmatpush.bf16.msra.mxu0 %v502
    %663 = vmatpush.bf16.msra.mxu0 %v498
    %664 = vmatpush.bf16.msra.mxu0 %v494
    %665 = vmatpush.bf16.msra.mxu0 %v490
    %666 = vmatpush.bf16.msra.mxu0 %v486
    %667 = vmatpush.bf16.msra.mxu0 %v482
    %668 = vmatmul.bf16.gmra.mxu0 %v286
    %v669 = vpop.f32.mrf.mxu0
    %v670 = vadd.f32 0.0, %v669
    %v671 = vpop.f32.mrf.mxu0
    %672 = vdwg.mxu0
    %673 = vmatpush.bf16.msra.mxu0 %v542
    %674 = vmatpush.bf16.msra.mxu0 %v538
    %675 = vmatpush.bf16.msra.mxu0 %v534
    %676 = vmatpush.bf16.msra.mxu0 %v530
    %677 = vmatpush.bf16.msra.mxu0 %v526
    %678 = vmatpush.bf16.msra.mxu0 %v522
    %679 = vmatpush.bf16.msra.mxu0 %v518
    %680 = vmatpush.bf16.msra.mxu0 %v514
    %681 = vmatmul.bf16.gmra.mxu0 %v287
    %v682 = vpop.f32.mrf.mxu0
    %v683 = vadd.f32 %v670, %v682
    %v684 = vpop.f32.mrf.mxu0
    %685 = vdwg.mxu0
    %686 = vmatpush.bf16.msra.mxu0 %v511
    %687 = vmatpush.bf16.msra.mxu0 %v507
    %688 = vmatpush.bf16.msra.mxu0 %v503
    %689 = vmatpush.bf16.msra.mxu0 %v499
    %690 = vmatpush.bf16.msra.mxu0 %v495
    %691 = vmatpush.bf16.msra.mxu0 %v491
    %692 = vmatpush.bf16.msra.mxu0 %v487
    %693 = vmatpush.bf16.msra.mxu0 %v483
    %694 = vmatmul.bf16.gmra.mxu0 %v286
    %v695 = vpop.f32.mrf.mxu0
    %v696 = vadd.f32 0.0, %v695
    %v697 = vpop.f32.mrf.mxu0
    %698 = vdwg.mxu0
    %699 = vmatpush.bf16.msra.mxu0 %v543
    %700 = vmatpush.bf16.msra.mxu0 %v539
    %701 = vmatpush.bf16.msra.mxu0 %v535
    %702 = vmatpush.bf16.msra.mxu0 %v531
    %703 = vmatpush.bf16.msra.mxu0 %v527
    %704 = vmatpush.bf16.msra.mxu0 %v523
    %705 = vmatpush.bf16.msra.mxu0 %v519
    %706 = vmatpush.bf16.msra.mxu0 %v515
    %707 = vmatmul.bf16.gmra.mxu0 %v287
    %v708 = vpop.f32.mrf.mxu0
    %v709 = vadd.f32 %v696, %v708
    %v710 = vpop.f32.mrf.mxu0
    %711 = vdwg.mxu0
    %v712 = vpack.c.bf16 %v205, %v205
    %v713 = vpack.c.bf16 %v218, %v218
    %714 = vmatpush.bf16.msra.mxu0 %v508
    %715 = vmatpush.bf16.msra.mxu0 %v504
    %716 = vmatpush.bf16.msra.mxu0 %v500
    %717 = vmatpush.bf16.msra.mxu0 %v496
    %718 = vmatpush.bf16.msra.mxu0 %v492
    %719 = vmatpush.bf16.msra.mxu0 %v488
    %720 = vmatpush.bf16.msra.mxu0 %v484
    %721 = vmatpush.bf16.msra.mxu0 %v480
    %722 = vmatmul.bf16.gmra.mxu0 %v712
    %v723 = vpop.f32.mrf.mxu0
    %v724 = vadd.f32 0.0, %v723
    %v725 = vpop.f32.mrf.mxu0
    %726 = vdwg.mxu0
    %727 = vmatpush.bf16.msra.mxu0 %v540
    %728 = vmatpush.bf16.msra.mxu0 %v536
    %729 = vmatpush.bf16.msra.mxu0 %v532
    %730 = vmatpush.bf16.msra.mxu0 %v528
    %731 = vmatpush.bf16.msra.mxu0 %v524
    %732 = vmatpush.bf16.msra.mxu0 %v520
    %733 = vmatpush.bf16.msra.mxu0 %v516
    %734 = vmatpush.bf16.msra.mxu0 %v512
    %735 = vmatmul.bf16.gmra.mxu0 %v713
    %v736 = vpop.f32.mrf.mxu0
    %v737 = vadd.f32 %v724, %v736
    %v738 = vpop.f32.mrf.mxu0
    %739 = vdwg.mxu0
    %740 = vmatpush.bf16.msra.mxu0 %v509
    %741 = vmatpush.bf16.msra.mxu0 %v505
    %742 = vmatpush.bf16.msra.mxu0 %v501
    %743 = vmatpush.bf16.msra.mxu0 %v497
    %744 = vmatpush.bf16.msra.mxu0 %v493
    %745 = vmatpush.bf16.msra.mxu0 %v489
    %746 = vmatpush.bf16.msra.mxu0 %v485
    %747 = vmatpush.bf16.msra.mxu0 %v481
    %748 = vmatmul.bf16.gmra.mxu0 %v712
    %v749 = vpop.f32.mrf.mxu0
    %v750 = vadd.f32 0.0, %v749
    %v751 = vpop.f32.mrf.mxu0
    %752 = vdwg.mxu0
    %753 = vmatpush.bf16.msra.mxu0 %v541
    %754 = vmatpush.bf16.msra.mxu0 %v537
    %755 = vmatpush.bf16.msra.mxu0 %v533
    %756 = vmatpush.bf16.msra.mxu0 %v529
    %757 = vmatpush.bf16.msra.mxu0 %v525
    %758 = vmatpush.bf16.msra.mxu0 %v521
    %759 = vmatpush.bf16.msra.mxu0 %v517
    %760 = vmatpush.bf16.msra.mxu0 %v513
    %761 = vmatmul.bf16.gmra.mxu0 %v713
    %v762 = vpop.f32.mrf.mxu0
    %v763 = vadd.f32 %v750, %v762
    %v764 = vpop.f32.mrf.mxu0
    %765 = vdwg.mxu0
    %766 = vmatpush.bf16.msra.mxu0 %v510
    %767 = vmatpush.bf16.msra.mxu0 %v506
    %768 = vmatpush.bf16.msra.mxu0 %v502
    %769 = vmatpush.bf16.msra.mxu0 %v498
    %770 = vmatpush.bf16.msra.mxu0 %v494
    %771 = vmatpush.bf16.msra.mxu0 %v490
    %772 = vmatpush.bf16.msra.mxu0 %v486
    %773 = vmatpush.bf16.msra.mxu0 %v482
    %774 = vmatmul.bf16.gmra.mxu0 %v712
    %v775 = vpop.f32.mrf.mxu0
    %v776 = vadd.f32 0.0, %v775
    %v777 = vpop.f32.mrf.mxu0
    %778 = vdwg.mxu0
    %779 = vmatpush.bf16.msra.mxu0 %v542
    %780 = vmatpush.bf16.msra.mxu0 %v538
    %781 = vmatpush.bf16.msra.mxu0 %v534
    %782 = vmatpush.bf16.msra.mxu0 %v530
    %783 = vmatpush.bf16.msra.mxu0 %v526
    %784 = vmatpush.bf16.msra.mxu0 %v522
    %785 = vmatpush.bf16.msra.mxu0 %v518
    %786 = vmatpush.bf16.msra.mxu0 %v514
    %787 = vmatmul.bf16.gmra.mxu0 %v713
    %v788 = vpop.f32.mrf.mxu0
    %v789 = vadd.f32 %v776, %v788
    %v790 = vpop.f32.mrf.mxu0
    %791 = vdwg.mxu0
    %792 = vmatpush.bf16.msra.mxu0 %v511
    %793 = vmatpush.bf16.msra.mxu0 %v507
    %794 = vmatpush.bf16.msra.mxu0 %v503
    %795 = vmatpush.bf16.msra.mxu0 %v499
    %796 = vmatpush.bf16.msra.mxu0 %v495
    %797 = vmatpush.bf16.msra.mxu0 %v491
    %798 = vmatpush.bf16.msra.mxu0 %v487
    %799 = vmatpush.bf16.msra.mxu0 %v483
    %800 = vmatmul.bf16.gmra.mxu0 %v712
    %v801 = vpop.f32.mrf.mxu0
    %v802 = vadd.f32 0.0, %v801
    %v803 = vpop.f32.mrf.mxu0
    %804 = vdwg.mxu0
    %805 = vmatpush.bf16.msra.mxu0 %v543
    %806 = vmatpush.bf16.msra.mxu0 %v539
    %807 = vmatpush.bf16.msra.mxu0 %v535
    %808 = vmatpush.bf16.msra.mxu0 %v531
    %809 = vmatpush.bf16.msra.mxu0 %v527
    %810 = vmatpush.bf16.msra.mxu0 %v523
    %811 = vmatpush.bf16.msra.mxu0 %v519
    %812 = vmatpush.bf16.msra.mxu0 %v515
    %813 = vmatmul.bf16.gmra.mxu0 %v713
    %v814 = vpop.f32.mrf.mxu0
    %v815 = vadd.f32 %v802, %v814
    %v816 = vpop.f32.mrf.mxu0
    %817 = vdwg.mxu0
    %v819 = vperm.slane %v285, 0
    %v820 = vperm.slane %v285, 1
    %v821 = vperm.slane %v285, 2
    %v822 = vperm.slane %v285, 3
    %v823 = vperm.slane %v285, 4
    %v824 = vperm.slane %v285, 5
    %v825 = vperm.slane %v285, 6
    %v826 = vperm.slane %v285, 7
    %v835 = vadd.f32 %v631, %v819
    %v836 = vadd.f32 %v657, %v820
    %v837 = vadd.f32 %v683, %v821
    %v838 = vadd.f32 %v709, %v822
    %v839 = vadd.f32 %v737, %v823
    %v840 = vadd.f32 %v763, %v824
    %v841 = vadd.f32 %v789, %v825
    %v842 = vadd.f32 %v815, %v826
    %v843 = vmax.f32 %v835, 0.0
    %v844 = vmax.f32 %v836, 0.0
    %v845 = vmax.f32 %v837, 0.0
    %v846 = vmax.f32 %v838, 0.0
    %v847 = vmax.f32 %v839, 0.0
    %v848 = vmax.f32 %v840, 0.0
    %v849 = vmax.f32 %v841, 0.0
    %v850 = vmax.f32 %v842, 0.0
    %v851 = vld [vmem:[#allocation11] sm:$0xff]
    %v852 = vld [vmem:[#allocation11 + $0x8] sm:$0xff]
    %v853 = vld [vmem:[#allocation11 + $0x10] sm:$0xff]
    %v854 = vld [vmem:[#allocation11 + $0x18] sm:$0xff]
    %v855 = vld [vmem:[#allocation11 + $0x20] sm:$0xff]
    %v856 = vld [vmem:[#allocation11 + $0x28] sm:$0xff]
    %v857 = vld [vmem:[#allocation11 + $0x30] sm:$0xff]
    %v858 = vld [vmem:[#allocation11 + $0x38] sm:$0xff]
    %v859 = vld [vmem:[#allocation11 + $0x40] sm:$0xff]
    %v860 = vld [vmem:[#allocation11 + $0x48] sm:$0xff]
    %v861 = vld [vmem:[#allocation11 + $0x50] sm:$0xff]
    %v862 = vld [vmem:[#allocation11 + $0x58] sm:$0xff]
    %v863 = vld [vmem:[#allocation11 + $0x60] sm:$0xff]
    %v864 = vld [vmem:[#allocation11 + $0x68] sm:$0xff]
    %v865 = vld [vmem:[#allocation11 + $0x70] sm:$0xff]
    %v866 = vld [vmem:[#allocation11 + $0x78] sm:$0xff]
    %v867 = vld [vmem:[#allocation11 + $0x80] sm:$0xff]
    %v868 = vld [vmem:[#allocation11 + $0x88] sm:$0xff]
    %v869 = vld [vmem:[#allocation11 + $0x90] sm:$0xff]
    %v870 = vld [vmem:[#allocation11 + $0x98] sm:$0xff]
    %v871 = vld [vmem:[#allocation11 + $0xa0] sm:$0xff]
    %v872 = vld [vmem:[#allocation11 + $0xa8] sm:$0xff]
    %v873 = vld [vmem:[#allocation11 + $0xb0] sm:$0xff]
    %v874 = vld [vmem:[#allocation11 + $0xb8] sm:$0xff]
    %v875 = vld [vmem:[#allocation11 + $0xc0] sm:$0xff]
    %v876 = vld [vmem:[#allocation11 + $0xc8] sm:$0xff]
    %v877 = vld [vmem:[#allocation11 + $0xd0] sm:$0xff]
    %v878 = vld [vmem:[#allocation11 + $0xd8] sm:$0xff]
    %v879 = vld [vmem:[#allocation11 + $0xe0] sm:$0xff]
    %v880 = vld [vmem:[#allocation11 + $0xe8] sm:$0xff]
    %v881 = vld [vmem:[#allocation11 + $0xf0] sm:$0xff]
    %v882 = vld [vmem:[#allocation11 + $0xf8] sm:$0xff]
    %v883 = vld [vmem:[#allocation13] sm:$0xff]
    %v884 = vpack.c.bf16 %v843, %v843
    %v885 = vpack.c.bf16 %v844, %v844
    %v918 = vunpack.c.l.b16 %v851
    %v919 = vunpack.c.h.b16 %v851
    %v920 = vunpack.c.l.b16 %v852
    %v921 = vunpack.c.h.b16 %v852
    %v922 = vunpack.c.l.b16 %v853
    %v923 = vunpack.c.h.b16 %v853
    %v924 = vunpack.c.l.b16 %v854
    %v925 = vunpack.c.h.b16 %v854
    %v926 = vunpack.c.l.b16 %v855
    %v927 = vunpack.c.h.b16 %v855
    %v928 = vunpack.c.l.b16 %v856
    %v929 = vunpack.c.h.b16 %v856
    %v930 = vunpack.c.l.b16 %v857
    %v931 = vunpack.c.h.b16 %v857
    %v932 = vunpack.c.l.b16 %v858
    %v933 = vunpack.c.h.b16 %v858
    %v934 = vunpack.c.l.b16 %v859
    %v935 = vunpack.c.h.b16 %v859
    %v936 = vunpack.c.l.b16 %v860
    %v937 = vunpack.c.h.b16 %v860
    %v938 = vunpack.c.l.b16 %v861
    %v939 = vunpack.c.h.b16 %v861
    %v940 = vunpack.c.l.b16 %v862
    %v941 = vunpack.c.h.b16 %v862
    %v942 = vunpack.c.l.b16 %v863
    %v943 = vunpack.c.h.b16 %v863
    %v944 = vunpack.c.l.b16 %v864
    %v945 = vunpack.c.h.b16 %v864
    %v946 = vunpack.c.l.b16 %v865
    %v947 = vunpack.c.h.b16 %v865
    %v948 = vunpack.c.l.b16 %v866
    %v949 = vunpack.c.h.b16 %v866
    %v950 = vunpack.c.l.b16 %v867
    %v951 = vunpack.c.h.b16 %v867
    %v952 = vunpack.c.l.b16 %v868
    %v953 = vunpack.c.h.b16 %v868
    %v954 = vunpack.c.l.b16 %v869
    %v955 = vunpack.c.h.b16 %v869
    %v956 = vunpack.c.l.b16 %v870
    %v957 = vunpack.c.h.b16 %v870
    %v958 = vunpack.c.l.b16 %v871
    %v959 = vunpack.c.h.b16 %v871
    %v960 = vunpack.c.l.b16 %v872
    %v961 = vunpack.c.h.b16 %v872
    %v962 = vunpack.c.l.b16 %v873
    %v963 = vunpack.c.h.b16 %v873
    %v964 = vunpack.c.l.b16 %v874
    %v965 = vunpack.c.h.b16 %v874
    %v966 = vunpack.c.l.b16 %v875
    %v967 = vunpack.c.h.b16 %v875
    %v968 = vunpack.c.l.b16 %v876
    %v969 = vunpack.c.h.b16 %v876
    %v970 = vunpack.c.l.b16 %v877
    %v971 = vunpack.c.h.b16 %v877
    %v972 = vunpack.c.l.b16 %v878
    %v973 = vunpack.c.h.b16 %v878
    %v974 = vunpack.c.l.b16 %v879
    %v975 = vunpack.c.h.b16 %v879
    %v976 = vunpack.c.l.b16 %v880
    %v977 = vunpack.c.h.b16 %v880
    %v978 = vunpack.c.l.b16 %v881
    %v979 = vunpack.c.h.b16 %v881
    %v980 = vunpack.c.l.b16 %v882
    %v981 = vunpack.c.h.b16 %v882
    %v982 = vpack.c.b16 %v920, %v918
    %v983 = vpack.c.b16 %v921, %v919
    %v984 = vpack.c.b16 %v924, %v922
    %v985 = vpack.c.b16 %v925, %v923
    %v986 = vpack.c.b16 %v928, %v926
    %v987 = vpack.c.b16 %v929, %v927
    %v988 = vpack.c.b16 %v932, %v930
    %v989 = vpack.c.b16 %v933, %v931
    %v990 = vpack.c.b16 %v936, %v934
    %v991 = vpack.c.b16 %v937, %v935
    %v992 = vpack.c.b16 %v940, %v938
    %v993 = vpack.c.b16 %v941, %v939
    %v994 = vpack.c.b16 %v944, %v942
    %v995 = vpack.c.b16 %v945, %v943
    %v996 = vpack.c.b16 %v948, %v946
    %v997 = vpack.c.b16 %v949, %v947
    %v998 = vpack.c.b16 %v952, %v950
    %v999 = vpack.c.b16 %v953, %v951
    %v1000 = vpack.c.b16 %v956, %v954
    %v1001 = vpack.c.b16 %v957, %v955
    %v1002 = vpack.c.b16 %v960, %v958
    %v1003 = vpack.c.b16 %v961, %v959
    %v1004 = vpack.c.b16 %v964, %v962
    %v1005 = vpack.c.b16 %v965, %v963
    %v1006 = vpack.c.b16 %v968, %v966
    %v1007 = vpack.c.b16 %v969, %v967
    %v1008 = vpack.c.b16 %v972, %v970
    %v1009 = vpack.c.b16 %v973, %v971
    %v1010 = vpack.c.b16 %v976, %v974
    %v1011 = vpack.c.b16 %v977, %v975
    %v1012 = vpack.c.b16 %v980, %v978
    %v1013 = vpack.c.b16 %v981, %v979
    %1046 = vmatpush.bf16.msra.mxu0 %v996
    %1047 = vmatpush.bf16.msra.mxu0 %v994
    %1048 = vmatpush.bf16.msra.mxu0 %v992
    %1049 = vmatpush.bf16.msra.mxu0 %v990
    %1050 = vmatpush.bf16.msra.mxu0 %v988
    %1051 = vmatpush.bf16.msra.mxu0 %v986
    %1052 = vmatpush.bf16.msra.mxu0 %v984
    %1053 = vmatpush.bf16.msra.mxu0 %v982
    %1054 = vmatmul.bf16.gmra.mxu0 %v884
    %v1055 = vpop.f32.mrf.mxu0
    %v1056 = vadd.f32 0.0, %v1055
    %v1057 = vpop.f32.mrf.mxu0
    %1058 = vdwg.mxu0
    %1059 = vmatpush.bf16.msra.mxu0 %v1012
    %1060 = vmatpush.bf16.msra.mxu0 %v1010
    %1061 = vmatpush.bf16.msra.mxu0 %v1008
    %1062 = vmatpush.bf16.msra.mxu0 %v1006
    %1063 = vmatpush.bf16.msra.mxu0 %v1004
    %1064 = vmatpush.bf16.msra.mxu0 %v1002
    %1065 = vmatpush.bf16.msra.mxu0 %v1000
    %1066 = vmatpush.bf16.msra.mxu0 %v998
    %1067 = vmatmul.bf16.gmra.mxu0 %v885
    %v1068 = vpop.f32.mrf.mxu0
    %v1069 = vadd.f32 %v1056, %v1068
    %v1070 = vpop.f32.mrf.mxu0
    %1071 = vdwg.mxu0
    %1072 = vmatpush.bf16.msra.mxu0 %v997
    %1073 = vmatpush.bf16.msra.mxu0 %v995
    %1074 = vmatpush.bf16.msra.mxu0 %v993
    %1075 = vmatpush.bf16.msra.mxu0 %v991
    %1076 = vmatpush.bf16.msra.mxu0 %v989
    %1077 = vmatpush.bf16.msra.mxu0 %v987
    %1078 = vmatpush.bf16.msra.mxu0 %v985
    %1079 = vmatpush.bf16.msra.mxu0 %v983
    %1080 = vmatmul.bf16.gmra.mxu0 %v884
    %v1081 = vpop.f32.mrf.mxu0
    %v1082 = vadd.f32 0.0, %v1081
    %v1083 = vpop.f32.mrf.mxu0
    %1084 = vdwg.mxu0
    %1085 = vmatpush.bf16.msra.mxu0 %v1013
    %1086 = vmatpush.bf16.msra.mxu0 %v1011
    %1087 = vmatpush.bf16.msra.mxu0 %v1009
    %1088 = vmatpush.bf16.msra.mxu0 %v1007
    %1089 = vmatpush.bf16.msra.mxu0 %v1005
    %1090 = vmatpush.bf16.msra.mxu0 %v1003
    %1091 = vmatpush.bf16.msra.mxu0 %v1001
    %1092 = vmatpush.bf16.msra.mxu0 %v999
    %1093 = vmatmul.bf16.gmra.mxu0 %v885
    %v1094 = vpop.f32.mrf.mxu0
    %v1095 = vadd.f32 %v1082, %v1094
    %v1096 = vpop.f32.mrf.mxu0
    %1097 = vdwg.mxu0
    %v1098 = vpack.c.bf16 %v845, %v845
    %v1099 = vpack.c.bf16 %v846, %v846
    %1100 = vmatpush.bf16.msra.mxu0 %v996
    %1101 = vmatpush.bf16.msra.mxu0 %v994
    %1102 = vmatpush.bf16.msra.mxu0 %v992
    %1103 = vmatpush.bf16.msra.mxu0 %v990
    %1104 = vmatpush.bf16.msra.mxu0 %v988
    %1105 = vmatpush.bf16.msra.mxu0 %v986
    %1106 = vmatpush.bf16.msra.mxu0 %v984
    %1107 = vmatpush.bf16.msra.mxu0 %v982
    %1108 = vmatmul.bf16.gmra.mxu0 %v1098
    %v1109 = vpop.f32.mrf.mxu0
    %v1110 = vadd.f32 0.0, %v1109
    %v1111 = vpop.f32.mrf.mxu0
    %1112 = vdwg.mxu0
    %1113 = vmatpush.bf16.msra.mxu0 %v1012
    %1114 = vmatpush.bf16.msra.mxu0 %v1010
    %1115 = vmatpush.bf16.msra.mxu0 %v1008
    %1116 = vmatpush.bf16.msra.mxu0 %v1006
    %1117 = vmatpush.bf16.msra.mxu0 %v1004
    %1118 = vmatpush.bf16.msra.mxu0 %v1002
    %1119 = vmatpush.bf16.msra.mxu0 %v1000
    %1120 = vmatpush.bf16.msra.mxu0 %v998
    %1121 = vmatmul.bf16.gmra.mxu0 %v1099
    %v1122 = vpop.f32.mrf.mxu0
    %v1123 = vadd.f32 %v1110, %v1122
    %v1124 = vpop.f32.mrf.mxu0
    %1125 = vdwg.mxu0
    %1126 = vmatpush.bf16.msra.mxu0 %v997
    %1127 = vmatpush.bf16.msra.mxu0 %v995
    %1128 = vmatpush.bf16.msra.mxu0 %v993
    %1129 = vmatpush.bf16.msra.mxu0 %v991
    %1130 = vmatpush.bf16.msra.mxu0 %v989
    %1131 = vmatpush.bf16.msra.mxu0 %v987
    %1132 = vmatpush.bf16.msra.mxu0 %v985
    %1133 = vmatpush.bf16.msra.mxu0 %v983
    %1134 = vmatmul.bf16.gmra.mxu0 %v1098
    %v1135 = vpop.f32.mrf.mxu0
    %v1136 = vadd.f32 0.0, %v1135
    %v1137 = vpop.f32.mrf.mxu0
    %1138 = vdwg.mxu0
    %1139 = vmatpush.bf16.msra.mxu0 %v1013
    %1140 = vmatpush.bf16.msra.mxu0 %v1011
    %1141 = vmatpush.bf16.msra.mxu0 %v1009
    %1142 = vmatpush.bf16.msra.mxu0 %v1007
    %1143 = vmatpush.bf16.msra.mxu0 %v1005
    %1144 = vmatpush.bf16.msra.mxu0 %v1003
    %1145 = vmatpush.bf16.msra.mxu0 %v1001
    %1146 = vmatpush.bf16.msra.mxu0 %v999
    %1147 = vmatmul.bf16.gmra.mxu0 %v1099
    %v1148 = vpop.f32.mrf.mxu0
    %v1149 = vadd.f32 %v1136, %v1148
    %v1150 = vpop.f32.mrf.mxu0
    %1151 = vdwg.mxu0
    %v1152 = vpack.c.bf16 %v847, %v847
    %v1153 = vpack.c.bf16 %v848, %v848
    %1154 = vmatpush.bf16.msra.mxu0 %v996
    %1155 = vmatpush.bf16.msra.mxu0 %v994
    %1156 = vmatpush.bf16.msra.mxu0 %v992
    %1157 = vmatpush.bf16.msra.mxu0 %v990
    %1158 = vmatpush.bf16.msra.mxu0 %v988
    %1159 = vmatpush.bf16.msra.mxu0 %v986
    %1160 = vmatpush.bf16.msra.mxu0 %v984
    %1161 = vmatpush.bf16.msra.mxu0 %v982
    %1162 = vmatmul.bf16.gmra.mxu0 %v1152
    %v1163 = vpop.f32.mrf.mxu0
    %v1164 = vadd.f32 0.0, %v1163
    %v1165 = vpop.f32.mrf.mxu0
    %1166 = vdwg.mxu0
    %1167 = vmatpush.bf16.msra.mxu0 %v1012
    %1168 = vmatpush.bf16.msra.mxu0 %v1010
    %1169 = vmatpush.bf16.msra.mxu0 %v1008
    %1170 = vmatpush.bf16.msra.mxu0 %v1006
    %1171 = vmatpush.bf16.msra.mxu0 %v1004
    %1172 = vmatpush.bf16.msra.mxu0 %v1002
    %1173 = vmatpush.bf16.msra.mxu0 %v1000
    %1174 = vmatpush.bf16.msra.mxu0 %v998
    %1175 = vmatmul.bf16.gmra.mxu0 %v1153
    %v1176 = vpop.f32.mrf.mxu0
    %v1177 = vadd.f32 %v1164, %v1176
    %v1178 = vpop.f32.mrf.mxu0
    %1179 = vdwg.mxu0
    %1180 = vmatpush.bf16.msra.mxu0 %v997
    %1181 = vmatpush.bf16.msra.mxu0 %v995
    %1182 = vmatpush.bf16.msra.mxu0 %v993
    %1183 = vmatpush.bf16.msra.mxu0 %v991
    %1184 = vmatpush.bf16.msra.mxu0 %v989
    %1185 = vmatpush.bf16.msra.mxu0 %v987
    %1186 = vmatpush.bf16.msra.mxu0 %v985
    %1187 = vmatpush.bf16.msra.mxu0 %v983
    %1188 = vmatmul.bf16.gmra.mxu0 %v1152
    %v1189 = vpop.f32.mrf.mxu0
    %v1190 = vadd.f32 0.0, %v1189
    %v1191 = vpop.f32.mrf.mxu0
    %1192 = vdwg.mxu0
    %1193 = vmatpush.bf16.msra.mxu0 %v1013
    %1194 = vmatpush.bf16.msra.mxu0 %v1011
    %1195 = vmatpush.bf16.msra.mxu0 %v1009
    %1196 = vmatpush.bf16.msra.mxu0 %v1007
    %1197 = vmatpush.bf16.msra.mxu0 %v1005
    %1198 = vmatpush.bf16.msra.mxu0 %v1003
    %1199 = vmatpush.bf16.msra.mxu0 %v1001
    %1200 = vmatpush.bf16.msra.mxu0 %v999
    %1201 = vmatmul.bf16.gmra.mxu0 %v1153
    %v1202 = vpop.f32.mrf.mxu0
    %v1203 = vadd.f32 %v1190, %v1202
    %v1204 = vpop.f32.mrf.mxu0
    %1205 = vdwg.mxu0
    %v1206 = vpack.c.bf16 %v849, %v849
    %v1207 = vpack.c.bf16 %v850, %v850
    %1208 = vmatpush.bf16.msra.mxu0 %v996
    %1209 = vmatpush.bf16.msra.mxu0 %v994
    %1210 = vmatpush.bf16.msra.mxu0 %v992
    %1211 = vmatpush.bf16.msra.mxu0 %v990
    %1212 = vmatpush.bf16.msra.mxu0 %v988
    %1213 = vmatpush.bf16.msra.mxu0 %v986
    %1214 = vmatpush.bf16.msra.mxu0 %v984
    %1215 = vmatpush.bf16.msra.mxu0 %v982
    %1216 = vmatmul.bf16.gmra.mxu0 %v1206
    %v1217 = vpop.f32.mrf.mxu0
    %v1218 = vadd.f32 0.0, %v1217
    %v1219 = vpop.f32.mrf.mxu0
    %1220 = vdwg.mxu0
    %1221 = vmatpush.bf16.msra.mxu0 %v1012
    %1222 = vmatpush.bf16.msra.mxu0 %v1010
    %1223 = vmatpush.bf16.msra.mxu0 %v1008
    %1224 = vmatpush.bf16.msra.mxu0 %v1006
    %1225 = vmatpush.bf16.msra.mxu0 %v1004
    %1226 = vmatpush.bf16.msra.mxu0 %v1002
    %1227 = vmatpush.bf16.msra.mxu0 %v1000
    %1228 = vmatpush.bf16.msra.mxu0 %v998
    %1229 = vmatmul.bf16.gmra.mxu0 %v1207
    %v1230 = vpop.f32.mrf.mxu0
    %v1231 = vadd.f32 %v1218, %v1230
    %v1232 = vpop.f32.mrf.mxu0
    %1233 = vdwg.mxu0
    %1234 = vmatpush.bf16.msra.mxu0 %v997
    %1235 = vmatpush.bf16.msra.mxu0 %v995
    %1236 = vmatpush.bf16.msra.mxu0 %v993
    %1237 = vmatpush.bf16.msra.mxu0 %v991
    %1238 = vmatpush.bf16.msra.mxu0 %v989
    %1239 = vmatpush.bf16.msra.mxu0 %v987
    %1240 = vmatpush.bf16.msra.mxu0 %v985
    %1241 = vmatpush.bf16.msra.mxu0 %v983
    %1242 = vmatmul.bf16.gmra.mxu0 %v1206
    %v1243 = vpop.f32.mrf.mxu0
    %v1244 = vadd.f32 0.0, %v1243
    %v1245 = vpop.f32.mrf.mxu0
    %1246 = vdwg.mxu0
    %1247 = vmatpush.bf16.msra.mxu0 %v1013
    %1248 = vmatpush.bf16.msra.mxu0 %v1011
    %1249 = vmatpush.bf16.msra.mxu0 %v1009
    %1250 = vmatpush.bf16.msra.mxu0 %v1007
    %1251 = vmatpush.bf16.msra.mxu0 %v1005
    %1252 = vmatpush.bf16.msra.mxu0 %v1003
    %1253 = vmatpush.bf16.msra.mxu0 %v1001
    %1254 = vmatpush.bf16.msra.mxu0 %v999
    %1255 = vmatmul.bf16.gmra.mxu0 %v1207
    %v1256 = vpop.f32.mrf.mxu0
    %v1257 = vadd.f32 %v1244, %v1256
    %v1258 = vpop.f32.mrf.mxu0
    %1259 = vdwg.mxu0
    %v1261 = vperm.slane %v883, 0
    %v1262 = vperm.slane %v883, 1
    %v1263 = vperm.slane %v883, 2
    %v1264 = vperm.slane %v883, 3
    %v1265 = vperm.slane %v883, 4
    %v1266 = vperm.slane %v883, 5
    %v1267 = vperm.slane %v883, 6
    %v1268 = vperm.slane %v883, 7
    %v1277 = vadd.f32 %v1069, %v1261
    %v1278 = vadd.f32 %v1095, %v1262
    %v1279 = vadd.f32 %v1123, %v1263
    %v1280 = vadd.f32 %v1149, %v1264
    %v1281 = vadd.f32 %v1177, %v1265
    %v1282 = vadd.f32 %v1203, %v1266
    %v1283 = vadd.f32 %v1231, %v1267
    %v1284 = vadd.f32 %v1257, %v1268
    %v1285 = vsub.f32 0.0, %v1277
    %v1286 = vsub.f32 0.0, %v1278
    %v1287 = vsub.f32 0.0, %v1279
    %v1288 = vsub.f32 0.0, %v1280
    %v1289 = vsub.f32 0.0, %v1281
    %v1290 = vsub.f32 0.0, %v1282
    %v1291 = vsub.f32 0.0, %v1283
    %v1292 = vsub.f32 0.0, %v1284
    %v1293 = vmul.f32 %v1285, 1.442695
    %v1294 = vpow.pop %v1293
    %v1295 = vmul.f32 %v1286, 1.442695
    %v1296 = vpow.pop %v1295
    %v1297 = vmul.f32 %v1287, 1.442695
    %v1298 = vpow.pop %v1297
    %v1299 = vmul.f32 %v1288, 1.442695
    %v1300 = vpow.pop %v1299
    %v1301 = vmul.f32 %v1289, 1.442695
    %v1302 = vpow.pop %v1301
    %v1303 = vmul.f32 %v1290, 1.442695
    %v1304 = vpow.pop %v1303
    %v1305 = vmul.f32 %v1291, 1.442695
    %v1306 = vpow.pop %v1305
    %v1307 = vmul.f32 %v1292, 1.442695
    %v1308 = vpow.pop %v1307
    %v1309 = vadd.f32 %v1294, 1.0
    %v1310 = vadd.f32 %v1296, 1.0
    %v1311 = vadd.f32 %v1298, 1.0
    %v1312 = vadd.f32 %v1300, 1.0
    %v1313 = vadd.f32 %v1302, 1.0
    %v1314 = vadd.f32 %v1304, 1.0
    %v1315 = vadd.f32 %v1306, 1.0
    %v1316 = vadd.f32 %v1308, 1.0
    %v1317 = vrcp.pop %v1309
    %v1318 = vrcp.pop %v1310
    %v1319 = vrcp.pop %v1311
    %v1320 = vrcp.pop %v1312
    %v1321 = vrcp.pop %v1313
    %v1322 = vrcp.pop %v1314
    %v1323 = vrcp.pop %v1315
    %v1324 = vrcp.pop %v1316
    %v1333 = vrot.slane %v1318, 6
    %v1334 = vrot.slane %v1319, 4
    %v1335 = vrot.slane %v1320, 2
    %v1336 = vrot.slane %v1322, 6
    %v1337 = vrot.slane %v1323, 4
    %v1338 = vrot.slane %v1324, 2
    %vm1339 = vcmask 1041408
    %v1340 = vsel %vm1339, %v1317, %v1333
    %vm1341 = vcmask 1045508
    %v1342 = vsel %vm1341, %v1334, %v1335
    %vm1343 = vcmask 1043456
    %v1344 = vsel %vm1343, %v1340, %v1342
    %v1345 = vsel %vm1339, %v1321, %v1336
    %v1346 = vsel %vm1341, %v1337, %v1338
    %v1347 = vsel %vm1343, %v1345, %v1346
    %1350 = vst [vmem:[#allocation14] sm:$0xff] %v1344
    %1351 = vst [vmem:[#allocation14 + $0x8] sm:$0xff] %v1347
    // Predicated region
    $region58: #{tpu_custom_call.1} parent=1 // pred_check
      _
    $region59: #{tpu_custom_call.1} parent=1 // pred_check_branch
      %1353 = sbr.rel (0) target = $region61
    $region60: #{tpu_custom_call.1} parent=1 // pred_region
      %1355 = vsyncadd [#allocation4], 0
      %s1357 = sshll.u32 [#allocation14], 4
      %s1358 = int_to_ptr.vmem [resolvable:$true] %s1357
      %s1359 = sshll.u32 %s7, 4
      %s1360 = int_to_ptr.hbm [resolvable:$true] %s1359
      %1362 = dma.vmem_to_hbm [thread:$0]  %s1358, 256, %s1360, [#allocation4]
    $region61: #{tpu_custom_call.1} parent=1 // pred_fallthru
      _
    // Predicated region
    $region62: #{tpu_custom_call.1} parent=1 // pred_check
      _
    $region63: #{tpu_custom_call.1} parent=1 // pred_check_branch
      %1364 = sbr.rel (0) target = $region65
    $region64: #{tpu_custom_call.1} parent=1 // pred_region
      %1366 = dma.done [#allocation4], 256
    $region65: #{tpu_custom_call.1} parent=1 // pred_fallthru
      _
    %1367 = vsyncpa [#allocation3], 1
    %1368 = vsyncpa [#allocation6], 1
    %1369 = vsyncpa [#allocation9], 1
    %1370 = vsyncpa [#allocation12], 1
    %1371 = vsyncpa [#allocation4], 1

</llo_original>
